<compile_context>
chip_gen: v7x
topology: tpu7x:2x2x1
jax: 0.10.0
libtpu: 0.0.40
codegen_flags: <defaults>
</compile_context>

<pallas_src>
import functools

import jax
import jax.numpy as jnp
from jax.experimental import pallas as pl
from jax.experimental.pallas import tpu as pltpu


# --------------------------------------------------------------------------- #
# Pallas kernel
# --------------------------------------------------------------------------- #
def temporal_block_kernel(x_ref, w1_ref, b1_ref, w2_ref, b2_ref, *rest,
                          kernel_size, dilation, hist, has_downsample,
                          carry_history):
    """One (batch, time-tile) grid step of the fused TemporalBlock.

    Block shapes (all in VMEM):
      x_ref : (1, Cin, TL)       time on lanes, channels on sublanes (f32)
      w1_ref: (Cout, K*Cin)      weight_norm folded, im2col (tap-major) layout, bf16
      b1_ref: (Cout, 1)          f32
      w2_ref: (Cout, K*Cout)     bf16
      b2_ref: (Cout, 1)          f32
      [wd_ref: (Cout, Cin) bf16, bd_ref: (Cout, 1) f32]   iff has_downsample
      o_ref : (1, Cout, TL)      f32
      xbuf  : (Cin,  hist + TL)  bf16 scratch - conv1 input + causal history
      hbuf  : (Cout, hist + TL)  bf16 scratch - conv2 input + causal history
    """
    if has_downsample:
        wd_ref, bd_ref, o_ref, xbuf, hbuf = rest
    else:
        o_ref, xbuf, hbuf = rest

    t = pl.program_id(1)
    pad = (kernel_size - 1) * dilation
    tl = x_ref.shape[-1]

    # First time tile of a sequence: causal zero padding.  This also clears any
    # history carried over from the previous batch element handled by this core.
    if pad > 0:
        @pl.when(t == 0)
        def _():
            xbuf[:, :hist] = jnp.zeros((xbuf.shape[0], hist), xbuf.dtype)
            hbuf[:, :hist] = jnp.zeros((hbuf.shape[0], hist), hbuf.dtype)

    x = x_ref[0]                                  # (Cin, TL) f32
    x_bf = x.astype(xbuf.dtype)
    xbuf[:, hist:] = x_bf                         # lane-aligned store at offset `hist`

    def causal_conv(buf_ref, w_ref, b_ref):
        # Causal dilated conv (== Conv1d(padding=pad) + Chomp1d(pad)) as ONE
        # im2col matmul: stack the K shifted views along sublanes and contract
        # over K*C in a single MXU op with f32 accumulation.
        full = buf_ref[...]                       # (C, hist + TL) bf16
        taps = []
        for k in range(kernel_size):              # K is tiny -> unrolled
            s = (kernel_size - 1 - k) * dilation
            taps.append(full[:, hist - s:hist - s + tl])
        stack = taps[0] if kernel_size == 1 else jnp.concatenate(taps, axis=0)
        return jnp.dot(w_ref[...], stack,
                       preferred_element_type=jnp.float32) + b_ref[...]

    # conv1 -> chomp1 -> relu1 -> dropout1 (identity at inference)
    h = jnp.maximum(causal_conv(xbuf, w1_ref, b1_ref), 0.0)        # (Cout, TL) f32
    hbuf[:, hist:] = h.astype(hbuf.dtype)

    # conv2 -> chomp2 -> relu2 -> dropout2 (identity at inference)
    out = jnp.maximum(causal_conv(hbuf, w2_ref, b2_ref), 0.0)      # (Cout, TL) f32

    # residual branch: 1x1 conv if channel counts differ, else identity
    if has_downsample:
        res = jnp.dot(wd_ref[...], x_bf,
                      preferred_element_type=jnp.float32) + bd_ref[...]
    else:
        res = x

    o_ref[0] = jnp.maximum(out + res, 0.0).astype(o_ref.dtype)

    # Carry the causal history (last `pad` columns of this tile's layer inputs)
    # into the lane-aligned left pad region for the next time tile.
    if carry_history and pad > 0:
        xbuf[:, hist - pad:hist] = x_bf[:, tl - pad:]
        hbuf[:, hist - pad:hist] = h[:, tl - pad:].astype(hbuf.dtype)


# --------------------------------------------------------------------------- #
# Wrapper
# --------------------------------------------------------------------------- #
def _weight_norm(v, g):
    """PyTorch weight_norm (dim=0): w = g * v / ||v||, norm over all dims but 0."""
    v = v.astype(jnp.float32)
    norm = jnp.sqrt(jnp.sum(v ** 2, axis=(1, 2), keepdims=True))
    return v * (g.reshape(-1, 1, 1).astype(jnp.float32) / norm)


def _im2col_weight(w):
    """(Cout, Cin, K) -> (Cout, K*Cin); column block k == tap k, matching the
    sublane stacking order used inside the kernel."""
    cout, cin, k = w.shape
    return jnp.transpose(w, (0, 2, 1)).reshape(cout, k * cin)


def temporal_block_forward(x, params, *, kernel_size, stride, dilation, padding,
                           time_tile=512, matmul_dtype=jnp.bfloat16,
                           training=False):
    """x: (B, n_inputs, L) f32 -> (B, n_outputs, L) f32 (eval / inference mode)."""
    if training:
        # TODO(synk): training-mode dropout not implemented.
        raise NotImplementedError("TemporalBlock Pallas kernel is inference-only")
    assert stride == 1, "Chomp1d-based TCN block requires stride == 1"
    assert padding == (kernel_size - 1) * dilation, (
        "TemporalBlock is used with causal padding = (kernel_size - 1) * dilation")

    B, c_in, L = x.shape
    v1, g1, b1 = params["conv1"]
    v2, g2, b2 = params["conv2"]
    ds = params["downsample"]
    c_out = v1.shape[0]
    pad = padding

    # Time tiling: lane-dense tiles with the causal history carried across
    # tiles in VMEM scratch.  Fall back to a single full-L tile if L does not
    # tile cleanly.  TODO(synk): support a ragged final tile.
    tl = time_tile
    if tl is None or L % tl != 0 or tl % 128 != 0 or pad > tl:
        tl = L
    nt = L // tl
    hist = 128 * ((pad + 127) // 128) if pad > 0 else 0   # lane-aligned history pad

    # Fold weight_norm once (tiny tensors), lay conv weights out for the fused
    # im2col matmul, and pre-cast matmul operands (f32 accumulation in-kernel).
    w1 = _im2col_weight(_weight_norm(v1, g1)).astype(matmul_dtype)
    w2 = _im2col_weight(_weight_norm(v2, g2)).astype(matmul_dtype)
    b1c = b1.reshape(c_out, 1).astype(jnp.float32)
    b2c = b2.reshape(c_out, 1).astype(jnp.float32)

    has_downsample = ds is not None
    if not has_downsample:
        assert c_in == c_out, "identity residual requires n_inputs == n_outputs"

    const2 = lambda b, t: (0, 0)
    inputs = [x.astype(jnp.float32), w1, b1c, w2, b2c]
    in_specs = [
        # One lane-dense (C, TL) tile per (batch, time) grid step.
        pl.BlockSpec((1, c_in, tl), lambda b, t: (b, 0, t)),
        # Weights / biases: constant index_maps -> stay resident in VMEM.
        pl.BlockSpec((c_out, kernel_size * c_in), const2),
        pl.BlockSpec((c_out, 1), const2),
        pl.BlockSpec((c_out, kernel_size * c_out), const2),
        pl.BlockSpec((c_out, 1), const2),
    ]
    if has_downsample:
        wd, bd = ds
        inputs += [wd.reshape(c_out, c_in).astype(matmul_dtype),
                   bd.reshape(c_out, 1).astype(jnp.float32)]
        in_specs += [pl.BlockSpec((c_out, c_in), const2),
                     pl.BlockSpec((c_out, 1), const2)]

    kernel = functools.partial(
        temporal_block_kernel, kernel_size=kernel_size, dilation=dilation,
        hist=hist, has_downsample=has_downsample,
        carry_history=(pad > 0 and nt > 1))

    return pl.pallas_call(
        kernel,
        out_shape=jax.ShapeDtypeStruct((B, c_out, L), jnp.float32),
        grid=(B, nt),
        in_specs=in_specs,
        out_specs=pl.BlockSpec((1, c_out, tl), lambda b, t: (b, 0, t)),
        scratch_shapes=[pltpu.VMEM((c_in, hist + tl), matmul_dtype),
                        pltpu.VMEM((c_out, hist + tl), matmul_dtype)],
        compiler_params=pltpu.CompilerParams(
            # batch shards across TensorCores (v7x megacore); time is the
            # sequential carry axis.
            dimension_semantics=("parallel", "arbitrary"),
            # Raise v5e's 16 MiB default scoped limit; comfortably below
            # v7x's 64 MiB physical VMEM at these tile sizes.
            vmem_limit_bytes=32 * 1024 * 1024),
    )(*inputs)


# --------------------------------------------------------------------------- #
# Pure-JAX reference (direct transcription of the PyTorch module, eval mode)
# --------------------------------------------------------------------------- #
def reference_forward(x, params, *, kernel_size, stride, dilation, padding):
    del stride  # == 1
    v1, g1, b1 = params["conv1"]
    v2, g2, b2 = params["conv2"]
    ds = params["downsample"]

    def conv1d_then_chomp(inp, w, b):
        # nn.Conv1d pads BOTH sides with `padding` zeros; Chomp1d drops the
        # last `padding` outputs.
        B, cin, L = inp.shape
        cout, _, K = w.shape
        xp = jnp.pad(inp, ((0, 0), (0, 0), (padding, padding)))
        L_full = L + 2 * padding - dilation * (K - 1)
        y = jnp.zeros((B, cout, L_full), jnp.float32)
        for k in range(K):
            xs = xp[:, :, k * dilation:k * dilation + L_full]
            y = y + jnp.einsum("oi,bil->bol", w[:, :, k], xs)
        y = y + b[None, :, None]
        return y[:, :, :L_full - padding]          # Chomp1d

    w1 = _weight_norm(v1, g1)
    w2 = _weight_norm(v2, g2)
    h = jax.nn.relu(conv1d_then_chomp(x, w1, b1))
    out = jax.nn.relu(conv1d_then_chomp(h, w2, b2))
    if ds is not None:
        wd, bd = ds
        res = jnp.einsum("oi,bil->bol", wd[:, :, 0], x) + bd[None, :, None]
    else:
        res = x
    return jax.nn.relu(out + res)


# --------------------------------------------------------------------------- #
# Demo / self-test
# --------------------------------------------------------------------------- #
def _make_params(key, n_in, n_out, K, with_downsample):
    k1, k2, kd, kb1, kb2, kbd = jax.random.split(key, 6)
    # init_weights(): conv weights ~ N(0, 0.01); weight_norm g initialized to ||v||
    v1 = 0.01 * jax.random.normal(k1, (n_out, n_in, K), jnp.float32)
    g1 = jnp.sqrt(jnp.sum(v1 ** 2, axis=(1, 2)))
    b1 = 0.05 * jax.random.normal(kb1, (n_out,), jnp.float32)
    v2 = 0.01 * jax.random.normal(k2, (n_out, n_out, K), jnp.float32)
    g2 = jnp.sqrt(jnp.sum(v2 ** 2, axis=(1, 2)))
    b2 = 0.05 * jax.random.normal(kb2, (n_out,), jnp.float32)
    if with_downsample:
        wd = 0.01 * jax.random.normal(kd, (n_out, n_in, 1), jnp.float32)
        bd = 0.05 * jax.random.normal(kbd, (n_out,), jnp.float32)
        ds = (wd, bd)
    else:
        ds = None
    return {"conv1": (v1, g1, b1), "conv2": (v2, g2, b2), "downsample": ds}


def _run_case(key, *, B, n_in, n_out, L, K, dilation, time_tile):
    kx, kp = jax.random.split(key)
    padding = (K - 1) * dilation
    x = jax.random.normal(kx, (B, n_in, L), jnp.float32)
    params = _make_params(kp, n_in, n_out, K, with_downsample=(n_in != n_out))

    y = temporal_block_forward(x, params, kernel_size=K, stride=1,
                               dilation=dilation, padding=padding,
                               time_tile=time_tile)
    y = jax.block_until_ready(y)
    y_ref = reference_forward(x, params, kernel_size=K, stride=1,
                              dilation=dilation, padding=padding)
    assert y.shape == (B, n_out, L)
    max_diff = float(jnp.max(jnp.abs(y - y_ref)))
    # bf16 matmul operands with f32 accumulation vs f32 reference.
    assert jnp.allclose(y, y_ref, atol=2e-2, rtol=2e-2), (
        f"mismatch vs JAX reference, max abs diff = {max_diff}")


if __name__ == "__main__":
    key = jax.random.PRNGKey(0)
    k1, k2 = jax.random.split(key)

    # Case 1: TemporalBlock(32 -> 64, K=3, dilation=2, padding=4) with a 1x1
    # downsample residual; 4 time tiles per batch element (8 grid steps total).
    _run_case(k1, B=2, n_in=32, n_out=64, L=2048, K=3, dilation=2, time_tile=512)

    # Case 2: identity residual path (n_in == n_out), dilation=1, padding=2.
    _run_case(k2, B=3, n_in=32, n_out=32, L=512, K=3, dilation=1, time_tile=256)

    print("KERNEL_OK")
</pallas_src>

<mosaic_0001>
module attributes {stable_mosaic.version = 11 : i64} {
  func.func @temporal_block_kernel(%arg0: i32, %arg1: i32, %arg2: memref<1x32x512xf32, #tpu.memory_space<vmem>>, %arg3: memref<64x96xbf16, #tpu.memory_space<vmem>>, %arg4: memref<64x1xf32, #tpu.memory_space<vmem>>, %arg5: memref<64x192xbf16, #tpu.memory_space<vmem>>, %arg6: memref<64x1xf32, #tpu.memory_space<vmem>>, %arg7: memref<64x32xbf16, #tpu.memory_space<vmem>>, %arg8: memref<64x1xf32, #tpu.memory_space<vmem>>, %arg9: memref<1x64x512xf32, #tpu.memory_space<vmem>>, %arg10: memref<32x640xbf16, #tpu.memory_space<vmem>>, %arg11: memref<64x640xbf16, #tpu.memory_space<vmem>>) attributes {dimension_semantics = [#tpu.dimension_semantics<parallel>, #tpu.dimension_semantics<arbitrary>], iteration_bounds = array<i64: 2, 4>, scalar_prefetch = 0 : i64, scratch_operands = 2 : i64, tpu.core_type = #tpu.core_type<tc>, window_params = [{transform_indices = @transform_0, window_bounds = array<i64: 1, 32, 512>}, {pipeline_mode = #tpu.pipeline_mode<synchronous>, transform_indices = @transform_1, window_bounds = array<i64: 64, 96>}, {pipeline_mode = #tpu.pipeline_mode<synchronous>, transform_indices = @transform_2, window_bounds = array<i64: 64, 1>}, {pipeline_mode = #tpu.pipeline_mode<synchronous>, transform_indices = @transform_3, window_bounds = array<i64: 64, 192>}, {pipeline_mode = #tpu.pipeline_mode<synchronous>, transform_indices = @transform_4, window_bounds = array<i64: 64, 1>}, {pipeline_mode = #tpu.pipeline_mode<synchronous>, transform_indices = @transform_5, window_bounds = array<i64: 64, 32>}, {pipeline_mode = #tpu.pipeline_mode<synchronous>, transform_indices = @transform_6, window_bounds = array<i64: 64, 1>}, {transform_indices = @transform_7, window_bounds = array<i64: 1, 64, 512>}]} {
    %c0_i32 = arith.constant 0 : i32
    %0 = arith.cmpi eq, %arg1, %c0_i32 : i32
    %1 = arith.extui %0 : i1 to i32
    %c0_i32_0 = arith.constant 0 : i32
    %2 = arith.cmpi ne, %1, %c0_i32_0 : i32
    scf.if %2 {
      %cst_33 = arith.constant 0.000000e+00 : bf16
      %49 = vector.broadcast %cst_33 : bf16 to vector<32x128xbf16>
      %c0_34 = arith.constant 0 : index
      %c0_35 = arith.constant 0 : index
      %50 = vector.load %arg10[%c0_34, %c0_35] : memref<32x640xbf16, #tpu.memory_space<vmem>>, vector<32x128xbf16>
      tpu.vector_store %arg10[%c0_34, %c0_35], %49 {strides = array<i32>} : memref<32x640xbf16, #tpu.memory_space<vmem>>, vector<32x128xbf16>,
      %cst_36 = arith.constant 0.000000e+00 : bf16
      %51 = vector.broadcast %cst_36 : bf16 to vector<64x128xbf16>
      %c0_37 = arith.constant 0 : index
      %c0_38 = arith.constant 0 : index
      %52 = vector.load %arg11[%c0_37, %c0_38] : memref<64x640xbf16, #tpu.memory_space<vmem>>, vector<64x128xbf16>
      tpu.vector_store %arg11[%c0_37, %c0_38], %51 {strides = array<i32>} : memref<64x640xbf16, #tpu.memory_space<vmem>>, vector<64x128xbf16>,
    } else {
    }
    %c0 = arith.constant 0 : index
    %c0_1 = arith.constant 0 : index
    %c0_2 = arith.constant 0 : index
    %3 = vector.load %arg2[%c0, %c0_1, %c0_2] : memref<1x32x512xf32, #tpu.memory_space<vmem>>, vector<1x32x512xf32>
    %4 = vector.shape_cast %3 : vector<1x32x512xf32> to vector<32x512xf32>
    %5 = arith.truncf %4 : vector<32x512xf32> to vector<32x512xbf16>
    %c0_3 = arith.constant 0 : index
    %c128 = arith.constant 128 : index
    %6 = vector.load %arg10[%c0_3, %c128] : memref<32x640xbf16, #tpu.memory_space<vmem>>, vector<32x512xbf16>
    tpu.vector_store %arg10[%c0_3, %c128], %5 {strides = array<i32>} : memref<32x640xbf16, #tpu.memory_space<vmem>>, vector<32x512xbf16>,
    %c0_4 = arith.constant 0 : index
    %c0_5 = arith.constant 0 : index
    %7 = vector.load %arg10[%c0_4, %c0_5] : memref<32x640xbf16, #tpu.memory_space<vmem>>, vector<32x640xbf16>
    %8 = vector.extract_strided_slice %7 {offsets = [0, 124], sizes = [32, 512], strides = [1, 1]} : vector<32x640xbf16> to vector<32x512xbf16>
    %9 = vector.extract_strided_slice %7 {offsets = [0, 126], sizes = [32, 512], strides = [1, 1]} : vector<32x640xbf16> to vector<32x512xbf16>
    %10 = vector.extract_strided_slice %7 {offsets = [0, 128], sizes = [32, 512], strides = [1, 1]} : vector<32x640xbf16> to vector<32x512xbf16>
    %11 = tpu.concatenate %8, %9, %10 in 0 : vector<32x512xbf16>, vector<32x512xbf16>, vector<32x512xbf16> -> vector<96x512xbf16>
    %c0_6 = arith.constant 0 : index
    %c0_7 = arith.constant 0 : index
    %12 = vector.load %arg3[%c0_6, %c0_7] : memref<64x96xbf16, #tpu.memory_space<vmem>>, vector<64x96xbf16>
    %cst = arith.constant dense<0.000000e+00> : vector<64x512xf32>
    %13 = tpu.matmul %12, %11, %cst {dimension_numbers = #tpu.dot_dimension_numbers<[1], [0], [0], [1], [0, 0, 1, 1], [], []>} : vector<64x96xbf16>, vector<96x512xbf16>, vector<64x512xf32> -> vector<64x512xf32>
    %c0_8 = arith.constant 0 : index
    %c0_9 = arith.constant 0 : index
    %14 = vector.load %arg4[%c0_8, %c0_9] : memref<64x1xf32, #tpu.memory_space<vmem>>, vector<64x1xf32>
    %15 = vector.broadcast %14 : vector<64x1xf32> to vector<64x512xf32>
    %16 = arith.addf %13, %15 : vector<64x512xf32>
    %cst_10 = arith.constant 0.000000e+00 : f32
    %17 = vector.broadcast %cst_10 : f32 to vector<64x512xf32>
    %18 = arith.maximumf %16, %17 : vector<64x512xf32>
    %19 = arith.truncf %18 : vector<64x512xf32> to vector<64x512xbf16>
    %c0_11 = arith.constant 0 : index
    %c128_12 = arith.constant 128 : index
    %20 = vector.load %arg11[%c0_11, %c128_12] : memref<64x640xbf16, #tpu.memory_space<vmem>>, vector<64x512xbf16>
    tpu.vector_store %arg11[%c0_11, %c128_12], %19 {strides = array<i32>} : memref<64x640xbf16, #tpu.memory_space<vmem>>, vector<64x512xbf16>,
    %c0_13 = arith.constant 0 : index
    %c0_14 = arith.constant 0 : index
    %21 = vector.load %arg11[%c0_13, %c0_14] : memref<64x640xbf16, #tpu.memory_space<vmem>>, vector<64x640xbf16>
    %22 = vector.extract_strided_slice %21 {offsets = [0, 124], sizes = [64, 512], strides = [1, 1]} : vector<64x640xbf16> to vector<64x512xbf16>
    %23 = vector.extract_strided_slice %21 {offsets = [0, 126], sizes = [64, 512], strides = [1, 1]} : vector<64x640xbf16> to vector<64x512xbf16>
    %24 = vector.extract_strided_slice %21 {offsets = [0, 128], sizes = [64, 512], strides = [1, 1]} : vector<64x640xbf16> to vector<64x512xbf16>
    %25 = tpu.concatenate %22, %23, %24 in 0 : vector<64x512xbf16>, vector<64x512xbf16>, vector<64x512xbf16> -> vector<192x512xbf16>
    %c0_15 = arith.constant 0 : index
    %c0_16 = arith.constant 0 : index
    %26 = vector.load %arg5[%c0_15, %c0_16] : memref<64x192xbf16, #tpu.memory_space<vmem>>, vector<64x192xbf16>
    %cst_17 = arith.constant dense<0.000000e+00> : vector<64x512xf32>
    %27 = tpu.matmul %26, %25, %cst_17 {dimension_numbers = #tpu.dot_dimension_numbers<[1], [0], [0], [1], [0, 0, 1, 1], [], []>} : vector<64x192xbf16>, vector<192x512xbf16>, vector<64x512xf32> -> vector<64x512xf32>
    %c0_18 = arith.constant 0 : index
    %c0_19 = arith.constant 0 : index
    %28 = vector.load %arg6[%c0_18, %c0_19] : memref<64x1xf32, #tpu.memory_space<vmem>>, vector<64x1xf32>
    %29 = vector.broadcast %28 : vector<64x1xf32> to vector<64x512xf32>
    %30 = arith.addf %27, %29 : vector<64x512xf32>
    %cst_20 = arith.constant 0.000000e+00 : f32
    %31 = vector.broadcast %cst_20 : f32 to vector<64x512xf32>
    %32 = arith.maximumf %30, %31 : vector<64x512xf32>
    %c0_21 = arith.constant 0 : index
    %c0_22 = arith.constant 0 : index
    %33 = vector.load %arg7[%c0_21, %c0_22] : memref<64x32xbf16, #tpu.memory_space<vmem>>, vector<64x32xbf16>
    %cst_23 = arith.constant dense<0.000000e+00> : vector<64x512xf32>
    %34 = tpu.matmul %33, %5, %cst_23 {dimension_numbers = #tpu.dot_dimension_numbers<[1], [0], [0], [1], [0, 0, 1, 1], [], []>} : vector<64x32xbf16>, vector<32x512xbf16>, vector<64x512xf32> -> vector<64x512xf32>
    %c0_24 = arith.constant 0 : index
    %c0_25 = arith.constant 0 : index
    %35 = vector.load %arg8[%c0_24, %c0_25] : memref<64x1xf32, #tpu.memory_space<vmem>>, vector<64x1xf32>
    %36 = vector.broadcast %35 : vector<64x1xf32> to vector<64x512xf32>
    %37 = arith.addf %34, %36 : vector<64x512xf32>
    %38 = arith.addf %32, %37 : vector<64x512xf32>
    %cst_26 = arith.constant 0.000000e+00 : f32
    %39 = vector.broadcast %cst_26 : f32 to vector<64x512xf32>
    %40 = arith.maximumf %38, %39 : vector<64x512xf32>
    %c0_27 = arith.constant 0 : index
    %c0_28 = arith.constant 0 : index
    %c0_29 = arith.constant 0 : index
    %41 = vector.load %arg9[%c0_27, %c0_28, %c0_29] : memref<1x64x512xf32, #tpu.memory_space<vmem>>, vector<1x64x512xf32>
    %42 = vector.shape_cast %41 : vector<1x64x512xf32> to vector<64x512xf32>
    %43 = vector.shape_cast %40 : vector<64x512xf32> to vector<1x64x512xf32>
    tpu.vector_store %arg9[%c0_27, %c0_28, %c0_29], %43 {strides = array<i32>} : memref<1x64x512xf32, #tpu.memory_space<vmem>>, vector<1x64x512xf32>,
    %44 = vector.extract_strided_slice %5 {offsets = [0, 508], sizes = [32, 4], strides = [1, 1]} : vector<32x512xbf16> to vector<32x4xbf16>
    %c0_30 = arith.constant 0 : index
    %c124 = arith.constant 124 : index
    %45 = vector.load %arg10[%c0_30, %c124] : memref<32x640xbf16, #tpu.memory_space<vmem>>, vector<32x4xbf16>
    tpu.vector_store %arg10[%c0_30, %c124], %44 {strides = array<i32>} : memref<32x640xbf16, #tpu.memory_space<vmem>>, vector<32x4xbf16>,
    %46 = vector.extract_strided_slice %18 {offsets = [0, 508], sizes = [64, 4], strides = [1, 1]} : vector<64x512xf32> to vector<64x4xf32>
    %47 = arith.truncf %46 : vector<64x4xf32> to vector<64x4xbf16>
    %c0_31 = arith.constant 0 : index
    %c124_32 = arith.constant 124 : index
    %48 = vector.load %arg11[%c0_31, %c124_32] : memref<64x640xbf16, #tpu.memory_space<vmem>>, vector<64x4xbf16>
    tpu.vector_store %arg11[%c0_31, %c124_32], %47 {strides = array<i32>} : memref<64x640xbf16, #tpu.memory_space<vmem>>, vector<64x4xbf16>,
    return
  }
  func.func @transform_0(%arg0: i32, %arg1: i32) -> (i32, i32, i32) {
    %c0_i32 = arith.constant 0 : i32
    %c0_i32_0 = arith.constant 0 : i32
    return %arg0, %c0_i32, %arg1 : i32, i32, i32
  }
  func.func @transform_1(%arg0: i32, %arg1: i32) -> (i32, i32) {
    %c0_i32 = arith.constant 0 : i32
    %c0_i32_0 = arith.constant 0 : i32
    %c0_i32_1 = arith.constant 0 : i32
    return %c0_i32, %c0_i32_0 : i32, i32
  }
  func.func @transform_2(%arg0: i32, %arg1: i32) -> (i32, i32) {
    %c0_i32 = arith.constant 0 : i32
    %c0_i32_0 = arith.constant 0 : i32
    %c0_i32_1 = arith.constant 0 : i32
    return %c0_i32, %c0_i32_0 : i32, i32
  }
  func.func @transform_3(%arg0: i32, %arg1: i32) -> (i32, i32) {
    %c0_i32 = arith.constant 0 : i32
    %c0_i32_0 = arith.constant 0 : i32
    %c0_i32_1 = arith.constant 0 : i32
    return %c0_i32, %c0_i32_0 : i32, i32
  }
  func.func @transform_4(%arg0: i32, %arg1: i32) -> (i32, i32) {
    %c0_i32 = arith.constant 0 : i32
    %c0_i32_0 = arith.constant 0 : i32
    %c0_i32_1 = arith.constant 0 : i32
    return %c0_i32, %c0_i32_0 : i32, i32
  }
  func.func @transform_5(%arg0: i32, %arg1: i32) -> (i32, i32) {
    %c0_i32 = arith.constant 0 : i32
    %c0_i32_0 = arith.constant 0 : i32
    %c0_i32_1 = arith.constant 0 : i32
    return %c0_i32, %c0_i32_0 : i32, i32
  }
  func.func @transform_6(%arg0: i32, %arg1: i32) -> (i32, i32) {
    %c0_i32 = arith.constant 0 : i32
    %c0_i32_0 = arith.constant 0 : i32
    %c0_i32_1 = arith.constant 0 : i32
    return %c0_i32, %c0_i32_0 : i32, i32
  }
  func.func @transform_7(%arg0: i32, %arg1: i32) -> (i32, i32, i32) {
    %c0_i32 = arith.constant 0 : i32
    %c0_i32_0 = arith.constant 0 : i32
    return %arg0, %c0_i32, %arg1 : i32, i32, i32
  }
}

</mosaic_0001>

<llo_original>
// kernel: tpu_custom_call.1
$region0: #{tpu_custom_call.1}
  #allocation0 [shape = 'u32[]', space=smem, size = 0x4, offset = 0x4, fixed_abs, tag = 'smem constant byte address 0x4 - core index']
  #allocation1 [shape = 'u32[144,128]{1,0:T(1,128)}', space=vmem, size = 0x12000, scoped, tag = 'internal scratch']
  #allocation2 [shape = 'bf16[32,640]{1,0:T(16,128)(2,1)}', space=vmem, size = 0xa000, scoped, tag = 'scratch operand']
  #allocation3 [shape = 'bf16[64,640]{1,0:T(16,128)(2,1)}', space=vmem, size = 0x14000, scoped, tag = 'scratch operand']
  %s0 = inlined_call_operand.hbm [shape: f32[2,32,2048], index: 0, kind: input, shape index: {}]
  %s1 = inlined_call_operand.vmem [shape: bf16[64,96], index: 1, kind: input, shape index: {}]
  %s2 = inlined_call_operand.vmem [shape: f32[64,1], index: 2, kind: input, shape index: {}]
  %s3 = inlined_call_operand.vmem [shape: bf16[64,192], index: 3, kind: input, shape index: {}]
  %s4 = inlined_call_operand.vmem [shape: f32[64,1], index: 4, kind: input, shape index: {}]
  %s5 = inlined_call_operand.vmem [shape: bf16[64,32], index: 5, kind: input, shape index: {}]
  %s6 = inlined_call_operand.vmem [shape: f32[64,1], index: 6, kind: input, shape index: {}]
  %s7 = inlined_call_operand.hbm [shape: f32[2,64,2048], index: 7, kind: output, shape index: {}]
  %s8 = sld [smem:[#allocation0]]
  $region69: #{tpu_custom_call.1} parent=0
    _
  %s10 = ssub.s32 1, %s8
  %s11 = scalar_select 0, %s10, %s8
  $region1: #{tpu_custom_call.1} parent=0
    #allocation4 [shape = 'u8[131072]{0}', space=vmem, size = 0x20000, scoped, tag = 'input window, operand 0']
    #allocation5 [shape = 's32[2]{0}', space=sflag, size = 0x8, scoped, tag = 'scoped memory for tpu_custom_call.1']
    #allocation6 [shape = 's32[2]{0}', space=sflag, size = 0x8, scoped, tag = 'scoped memory for tpu_custom_call.1']
    #allocation7 [shape = 'u8[262144]{0}', space=vmem, size = 0x40000, scoped, tag = 'output window, operand 0']
    %12 = vsyncpa [#allocation5], 0
    %s13 = scalar_lea.sflag [#allocation5], 1
    %14 = vsyncpa %s13, 0
    %15 = vsyncpa [#allocation6], 0
    %s16 = scalar_lea.sflag [#allocation6], 1
    %17 = vsyncpa %s16, 0
    loop: start=0, step=1, limit=10
    $region2: #{tpu_custom_call.1} parent=1 // loop_pre_header
      _
    $region3: #{tpu_custom_call.1} parent=1 // loop_header
      %s19 = sphi 0, %s23
      %p20 = scmp.ge.s32.totalorder %s19, 10
      %s26 = sphi 0, %s38
      %s27 = sphi 0, %s34
      %s28 = sphi 0, %s26
      %s29 = sphi 0, %s27
      %s30 = sphi 0, %s28
      %s31 = sphi 0, %s29
      %s43 = sphi 0, %s45
      %s46 = sphi 0, %s43
      %s47 = sphi 0, %s46
      %s63 = sphi 0, %s47
      %s67 = sphi 0, %s67
      %s69 = sphi 0, %s67
      %s70 = sphi 0, %s69
      %s84 = sphi 0, %s70
      %s88 = sphi 0, %s88
      %s90 = sphi 0, %s88
      %s91 = sphi 0, %s90
      %s105 = sphi 0, %s91
      %s109 = sphi 0, %s109
      %s111 = sphi 0, %s109
      %s112 = sphi 0, %s111
      %s126 = sphi 0, %s112
      %s130 = sphi 0, %s130
      %s132 = sphi 0, %s130
      %s133 = sphi 0, %s132
      %s147 = sphi 0, %s133
      %s151 = sphi 0, %s151
      %s153 = sphi 0, %s151
      %s154 = sphi 0, %s153
      %s168 = sphi 0, %s154
      %s172 = sphi 0, %s172
      %s174 = sphi 0, %s172
      %s175 = sphi 0, %s174
      %s189 = sphi 0, %s175
      %s197 = sphi 0, %s199
      %s200 = sphi 0, %s197
      %s201 = sphi 0, %s200
      %s217 = sphi 0, %s201
    $region4: #{tpu_custom_call.1} parent=1 // loop_header_branch
      %22 = sbr.rel (%p20) target = $region8
    $region5: #{tpu_custom_call.1} parent=1 // loop_body
      %s24 = ssub.s32 %s19, 1
      %s25 = ssub.s32 %s19, 2
      %s32 = sadd.s32 1, %s27
      %p33 = scmp.ge.s32.totalorder %s32, 4
      %s34 = scalar_select %p33, 0, %s32
      %s35 = sadd.s32 1, %s26
      %s36 = scalar_select %p33, %s35, %s26
      %p37 = scmp.ge.s32.totalorder %s36, 2
      %s38 = scalar_select %p37, 0, %s36
      %s39 = ssub.s32 %s26, %s38
      %s40 = ssub.s32 %s27, %s34
      %s41 = sor.u32 %s39, %s40
      %p42 = scmp.eq.s32.totalorder %s41, 0
      %s44 = sadd.s32 %s43, 1
      %s45 = scalar_select %p42, %s43, %s44
      %p48 = pneg %p42
      %p49 = scmp.eq.s32.totalorder %s19, 7
      %p50 = por %p48, %p49
      %p51 = scmp.ne.s32.totalorder %s43, %s46
      %p52 = scmp.eq.s32.totalorder %s19, 0
      %p53 = por %p51, %p52
      %p54 = scmp.ne.s32.totalorder %s43, %s46
      %p55 = scmp.eq.s32.totalorder %s24, 7
      %p56 = por %p54, %p55
      %p57 = scmp.ne.s32.totalorder %s46, %s47
      %p58 = scmp.eq.s32.totalorder %s24, 0
      %p59 = por %p57, %p58
      %p60 = scmp.ne.s32.totalorder %s46, %s47
      %p61 = scmp.eq.s32.totalorder %s25, 7
      %p62 = por %p60, %p61
      %p64 = scmp.ne.s32.totalorder %s47, %s63
      %p65 = scmp.eq.s32.totalorder %s25, 0
      %p66 = por %p64, %p65
      %s68 = sadd.s32 %s67, 1
      %p71 = scmp.eq.s32.totalorder %s19, 7
      %p72 = scmp.ne.s32.totalorder %s67, %s69
      %p73 = scmp.eq.s32.totalorder %s19, 0
      %p74 = por %p72, %p73
      %p75 = scmp.ne.s32.totalorder %s67, %s69
      %p76 = scmp.eq.s32.totalorder %s24, 7
      %p77 = por %p75, %p76
      %p78 = scmp.ne.s32.totalorder %s69, %s70
      %p79 = scmp.eq.s32.totalorder %s24, 0
      %p80 = por %p78, %p79
      %p81 = scmp.ne.s32.totalorder %s69, %s70
      %p82 = scmp.eq.s32.totalorder %s25, 7
      %p83 = por %p81, %p82
      %p85 = scmp.ne.s32.totalorder %s70, %s84
      %p86 = scmp.eq.s32.totalorder %s25, 0
      %p87 = por %p85, %p86
      %s89 = sadd.s32 %s88, 1
      %p92 = scmp.eq.s32.totalorder %s19, 7
      %p93 = scmp.ne.s32.totalorder %s88, %s90
      %p94 = scmp.eq.s32.totalorder %s19, 0
      %p95 = por %p93, %p94
      %p96 = scmp.ne.s32.totalorder %s88, %s90
      %p97 = scmp.eq.s32.totalorder %s24, 7
      %p98 = por %p96, %p97
      %p99 = scmp.ne.s32.totalorder %s90, %s91
      %p100 = scmp.eq.s32.totalorder %s24, 0
      %p101 = por %p99, %p100
      %p102 = scmp.ne.s32.totalorder %s90, %s91
      %p103 = scmp.eq.s32.totalorder %s25, 7
      %p104 = por %p102, %p103
      %p106 = scmp.ne.s32.totalorder %s91, %s105
      %p107 = scmp.eq.s32.totalorder %s25, 0
      %p108 = por %p106, %p107
      %s110 = sadd.s32 %s109, 1
      %p113 = scmp.eq.s32.totalorder %s19, 7
      %p114 = scmp.ne.s32.totalorder %s109, %s111
      %p115 = scmp.eq.s32.totalorder %s19, 0
      %p116 = por %p114, %p115
      %p117 = scmp.ne.s32.totalorder %s109, %s111
      %p118 = scmp.eq.s32.totalorder %s24, 7
      %p119 = por %p117, %p118
      %p120 = scmp.ne.s32.totalorder %s111, %s112
      %p121 = scmp.eq.s32.totalorder %s24, 0
      %p122 = por %p120, %p121
      %p123 = scmp.ne.s32.totalorder %s111, %s112
      %p124 = scmp.eq.s32.totalorder %s25, 7
      %p125 = por %p123, %p124
      %p127 = scmp.ne.s32.totalorder %s112, %s126
      %p128 = scmp.eq.s32.totalorder %s25, 0
      %p129 = por %p127, %p128
      %s131 = sadd.s32 %s130, 1
      %p134 = scmp.eq.s32.totalorder %s19, 7
      %p135 = scmp.ne.s32.totalorder %s130, %s132
      %p136 = scmp.eq.s32.totalorder %s19, 0
      %p137 = por %p135, %p136
      %p138 = scmp.ne.s32.totalorder %s130, %s132
      %p139 = scmp.eq.s32.totalorder %s24, 7
      %p140 = por %p138, %p139
      %p141 = scmp.ne.s32.totalorder %s132, %s133
      %p142 = scmp.eq.s32.totalorder %s24, 0
      %p143 = por %p141, %p142
      %p144 = scmp.ne.s32.totalorder %s132, %s133
      %p145 = scmp.eq.s32.totalorder %s25, 7
      %p146 = por %p144, %p145
      %p148 = scmp.ne.s32.totalorder %s133, %s147
      %p149 = scmp.eq.s32.totalorder %s25, 0
      %p150 = por %p148, %p149
      %s152 = sadd.s32 %s151, 1
      %p155 = scmp.eq.s32.totalorder %s19, 7
      %p156 = scmp.ne.s32.totalorder %s151, %s153
      %p157 = scmp.eq.s32.totalorder %s19, 0
      %p158 = por %p156, %p157
      %p159 = scmp.ne.s32.totalorder %s151, %s153
      %p160 = scmp.eq.s32.totalorder %s24, 7
      %p161 = por %p159, %p160
      %p162 = scmp.ne.s32.totalorder %s153, %s154
      %p163 = scmp.eq.s32.totalorder %s24, 0
      %p164 = por %p162, %p163
      %p165 = scmp.ne.s32.totalorder %s153, %s154
      %p166 = scmp.eq.s32.totalorder %s25, 7
      %p167 = por %p165, %p166
      %p169 = scmp.ne.s32.totalorder %s154, %s168
      %p170 = scmp.eq.s32.totalorder %s25, 0
      %p171 = por %p169, %p170
      %s173 = sadd.s32 %s172, 1
      %p176 = scmp.eq.s32.totalorder %s19, 7
      %p177 = scmp.ne.s32.totalorder %s172, %s174
      %p178 = scmp.eq.s32.totalorder %s19, 0
      %p179 = por %p177, %p178
      %p180 = scmp.ne.s32.totalorder %s172, %s174
      %p181 = scmp.eq.s32.totalorder %s24, 7
      %p182 = por %p180, %p181
      %p183 = scmp.ne.s32.totalorder %s174, %s175
      %p184 = scmp.eq.s32.totalorder %s24, 0
      %p185 = por %p183, %p184
      %p186 = scmp.ne.s32.totalorder %s174, %s175
      %p187 = scmp.eq.s32.totalorder %s25, 7
      %p188 = por %p186, %p187
      %p190 = scmp.ne.s32.totalorder %s175, %s189
      %p191 = scmp.eq.s32.totalorder %s25, 0
      %p192 = por %p190, %p191
      %s193 = ssub.s32 %s26, %s38
      %s194 = ssub.s32 %s27, %s34
      %s195 = sor.u32 %s193, %s194
      %p196 = scmp.eq.s32.totalorder %s195, 0
      %s198 = sadd.s32 %s197, 1
      %s199 = scalar_select %p196, %s197, %s198
      %p202 = pneg %p196
      %p203 = scmp.eq.s32.totalorder %s19, 7
      %p204 = por %p202, %p203
      %p205 = scmp.ne.s32.totalorder %s197, %s200
      %p206 = scmp.eq.s32.totalorder %s19, 0
      %p207 = por %p205, %p206
      %p208 = scmp.ne.s32.totalorder %s197, %s200
      %p209 = scmp.eq.s32.totalorder %s24, 7
      %p210 = por %p208, %p209
      %p211 = scmp.ne.s32.totalorder %s200, %s201
      %p212 = scmp.eq.s32.totalorder %s24, 0
      %p213 = por %p211, %p212
      %p214 = scmp.ne.s32.totalorder %s200, %s201
      %p215 = scmp.eq.s32.totalorder %s25, 7
      %p216 = por %p214, %p215
      %p218 = scmp.ne.s32.totalorder %s201, %s217
      %p219 = scmp.eq.s32.totalorder %s25, 0
      %p220 = por %p218, %p219
      %p221 = scmp.le.s32.totalorder 1, %s19
      %p222 = scmp.lt.s32.totalorder %s19, 9
      %p223 = pnand %p221, %p222
      %p224 = pneg %p223
      // Predicated region
      $region9: #{tpu_custom_call.1} parent=5 // pred_check
        _
      $region10: #{tpu_custom_call.1} parent=5 // pred_check_branch
        %226 = sbr.rel (%p223) target = $region12
      $region11: #{tpu_custom_call.1} parent=5 // pred_region
        %s227 = ssub.s32 %s19, 1
        // Predicated region
        $region13: #{tpu_custom_call.1} parent=11 // pred_check
          %p228 = pneg %p80
        $region14: #{tpu_custom_call.1} parent=11 // pred_check_branch
          %230 = sbr.rel (%p228) target = $region16
        $region15: #{tpu_custom_call.1} parent=11 // pred_region
          _
        $region16: #{tpu_custom_call.1} parent=11 // pred_fallthru
          _
        // Predicated region
        $region17: #{tpu_custom_call.1} parent=11 // pred_check
          %p231 = pneg %p101
        $region18: #{tpu_custom_call.1} parent=11 // pred_check_branch
          %233 = sbr.rel (%p231) target = $region20
        $region19: #{tpu_custom_call.1} parent=11 // pred_region
          _
        $region20: #{tpu_custom_call.1} parent=11 // pred_fallthru
          _
        // Predicated region
        $region21: #{tpu_custom_call.1} parent=11 // pred_check
          %p234 = pneg %p122
        $region22: #{tpu_custom_call.1} parent=11 // pred_check_branch
          %236 = sbr.rel (%p234) target = $region24
        $region23: #{tpu_custom_call.1} parent=11 // pred_region
          _
        $region24: #{tpu_custom_call.1} parent=11 // pred_fallthru
          _
        // Predicated region
        $region25: #{tpu_custom_call.1} parent=11 // pred_check
          %p237 = pneg %p143
        $region26: #{tpu_custom_call.1} parent=11 // pred_check_branch
          %239 = sbr.rel (%p237) target = $region28
        $region27: #{tpu_custom_call.1} parent=11 // pred_region
          _
        $region28: #{tpu_custom_call.1} parent=11 // pred_fallthru
          _
        // Predicated region
        $region29: #{tpu_custom_call.1} parent=11 // pred_check
          %p240 = pneg %p164
        $region30: #{tpu_custom_call.1} parent=11 // pred_check_branch
          %242 = sbr.rel (%p240) target = $region32
        $region31: #{tpu_custom_call.1} parent=11 // pred_region
          _
        $region32: #{tpu_custom_call.1} parent=11 // pred_fallthru
          _
        // Predicated region
        $region33: #{tpu_custom_call.1} parent=11 // pred_check
          %p243 = pneg %p185
        $region34: #{tpu_custom_call.1} parent=11 // pred_check_branch
          %245 = sbr.rel (%p243) target = $region36
        $region35: #{tpu_custom_call.1} parent=11 // pred_region
          _
        $region36: #{tpu_custom_call.1} parent=11 // pred_fallthru
          _
      $region12: #{tpu_custom_call.1} parent=5 // pred_fallthru
        _
      %p246 = scmp.lt.s32.totalorder %s19, 8
      // Predicated region
      $region37: #{tpu_custom_call.1} parent=5 // pred_check
        %p247 = pneg %p246
      $region38: #{tpu_custom_call.1} parent=5 // pred_check_branch
        %249 = sbr.rel (%p247) target = $region40
      $region39: #{tpu_custom_call.1} parent=5 // pred_region
        // Predicated region
        $region41: #{tpu_custom_call.1} parent=39 // pred_check
          %p250 = pneg %p53
        $region42: #{tpu_custom_call.1} parent=39 // pred_check_branch
          %252 = sbr.rel (%p250) target = $region44
        $region43: #{tpu_custom_call.1} parent=39 // pred_region
          %s253 = sand.u32 %s43, 1
          %s254 = scalar_lea.sflag [#allocation5], %s253
          %s255 = sand.u32 %s43, 1
          %s256 = smul.addr %s255, 128
          %s257 = scalar_lea.vmem [#allocation4], %s256
          %s258 = smul.u32 4, %s27
          %s260 = ssub.s32 2048, 2048
          %261 = vsyncadd %s254, %s260
          %s262 = smul.addr %s26, 64
          %s263 = sadd.s32 %s258, %s262
          %s264 = smul.addr %s263, 128
          %s265 = scalar_lea.hbm %s0, %s264
          %s266 = sshll.u32 %s257, 4
          %s267 = int_to_ptr.vmem [resolvable:$true] %s266
          %272 = dma.hbm_to_vmem [thread:$0]  %s265, 2048, %s267, %s254, 2048, 512, 32
        $region44: #{tpu_custom_call.1} parent=39 // pred_fallthru
          _
      $region40: #{tpu_custom_call.1} parent=5 // pred_fallthru
        _
      %p273 = scmp.le.s32.totalorder 1, %s19
      %p274 = scmp.lt.s32.totalorder %s19, 9
      %p275 = pnand %p273, %p274
      %p276 = pneg %p275
      // Predicated region
      $region45: #{tpu_custom_call.1} parent=5 // pred_check
        _
      $region46: #{tpu_custom_call.1} parent=5 // pred_check_branch
        %278 = sbr.rel (%p275) target = $region48
      $region47: #{tpu_custom_call.1} parent=5 // pred_region
        %s279 = ssub.s32 %s19, 1
        %s280 = sand.u32 %s46, 1
        %s281 = scalar_lea.sflag [#allocation5], %s280
        %s282 = sand.u32 %s46, 1
        %s283 = smul.addr %s282, 128
        %s284 = scalar_lea.vmem [#allocation4], %s283
        // Predicated region
        $region49: #{tpu_custom_call.1} parent=47 // pred_check
          %p285 = pneg %p59
        $region50: #{tpu_custom_call.1} parent=47 // pred_check_branch
          %287 = sbr.rel (%p285) target = $region52
        $region51: #{tpu_custom_call.1} parent=47 // pred_region
          %288 = dma.done %s281, 2048
        $region52: #{tpu_custom_call.1} parent=47 // pred_fallthru
          _
        %s289 = sand.u32 %s46, 1
        %s290 = scalar_lea.sflag [#allocation5], %s289
        %s291 = sand.u32 %s46, 1
        %s292 = smul.addr %s291, 128
        %s293 = scalar_lea.vmem [#allocation4], %s292
        %p294 = pneg %p59
        %p295 = pneg %p56
        %p296 = pneg %p80
        %p297 = pneg %p77
        %p298 = pneg %p101
        %p299 = pneg %p98
        %p300 = pneg %p122
        %p301 = pneg %p119
        %p302 = pneg %p143
        %p303 = pneg %p140
        %p304 = pneg %p164
        %p305 = pneg %p161
        %p306 = pneg %p185
        %p307 = pneg %p182
        %p308 = pneg %p213
        %p309 = pneg %p210
        %s310 = sand.u32 %s200, 1
        %s311 = scalar_lea.sflag [#allocation6], %s310
        %s312 = sand.u32 %s200, 1
        %s313 = smul.addr %s312, 256
        %s314 = scalar_lea.vmem [#allocation7], %s313
        %s315 = smul.u32 4, %s29
        %s316 = smul.u32 4, %s29
        %p318 = scmp.eq.s32.totalorder %s29, 0
        // Predicated region
        $region53: #{tpu_custom_call.1} parent=47 // pred_check
          %p319 = pneg %p318
        $region54: #{tpu_custom_call.1} parent=47 // pred_check_branch
          %321 = sbr.rel (%p319) target = $region56
        $region55: #{tpu_custom_call.1} parent=47 // pred_region
          %322 = vst [vmem:[#allocation2] sm:$0xff] 0
          %323 = vst [vmem:[#allocation2 + $0x28] sm:$0xff] 0
          %324 = vst [vmem:[#allocation3] sm:$0xff] 0
          %325 = vst [vmem:[#allocation3 + $0x28] sm:$0xff] 0
          %326 = vst [vmem:[#allocation3 + $0x50] sm:$0xff] 0
          %327 = vst [vmem:[#allocation3 + $0x78] sm:$0xff] 0
        $region56: #{tpu_custom_call.1} parent=47 // pred_fallthru
          _
        %v328 = vld [vmem:[%s284] sm:$0xff]
        %v329 = vld [vmem:[%s284 + $0x8] sm:$0xff]
        %v330 = vld [vmem:[%s284 + $0x10] sm:$0xff]
        %v331 = vld [vmem:[%s284 + $0x18] sm:$0xff]
        %v332 = vld [vmem:[%s284 + $0x20] sm:$0xff]
        %v333 = vld [vmem:[%s284 + $0x28] sm:$0xff]
        %v334 = vld [vmem:[%s284 + $0x30] sm:$0xff]
        %v335 = vld [vmem:[%s284 + $0x38] sm:$0xff]
        %v336 = vld [vmem:[%s284 + $0x40] sm:$0xff]
        %v337 = vld [vmem:[%s284 + $0x48] sm:$0xff]
        %v338 = vld [vmem:[%s284 + $0x50] sm:$0xff]
        %v339 = vld [vmem:[%s284 + $0x58] sm:$0xff]
        %v340 = vld [vmem:[%s284 + $0x60] sm:$0xff]
        %v341 = vld [vmem:[%s284 + $0x68] sm:$0xff]
        %v342 = vld [vmem:[%s284 + $0x70] sm:$0xff]
        %v343 = vld [vmem:[%s284 + $0x78] sm:$0xff]
        %v344 = vpack.c.bf16 %v332, %v328
        %v345 = vpack.c.bf16 %v333, %v329
        %v346 = vpack.c.bf16 %v334, %v330
        %v347 = vpack.c.bf16 %v335, %v331
        %v348 = vpack.c.bf16 %v340, %v336
        %v349 = vpack.c.bf16 %v341, %v337
        %v350 = vpack.c.bf16 %v342, %v338
        %v351 = vpack.c.bf16 %v343, %v339
        %352 = vst [vmem:[#allocation2 + $0x8] sm:$0xff] %v344
        %353 = vst [vmem:[#allocation2 + $0x10] sm:$0xff] %v345
        %354 = vst [vmem:[#allocation2 + $0x18] sm:$0xff] %v346
        %355 = vst [vmem:[#allocation2 + $0x20] sm:$0xff] %v347
        %356 = vst [vmem:[#allocation2 + $0x30] sm:$0xff] %v348
        %357 = vst [vmem:[#allocation2 + $0x38] sm:$0xff] %v349
        %358 = vst [vmem:[#allocation2 + $0x40] sm:$0xff] %v350
        %359 = vst [vmem:[#allocation2 + $0x48] sm:$0xff] %v351
        %v360 = vld [vmem:[#allocation2] sm:$0xff]
        %v361 = vld [vmem:[#allocation2 + $0x8] sm:$0xff]
        %v362 = vld [vmem:[#allocation2 + $0x10] sm:$0xff]
        %v363 = vld [vmem:[#allocation2 + $0x18] sm:$0xff]
        %v364 = vld [vmem:[#allocation2 + $0x20] sm:$0xff]
        %v365 = vld [vmem:[#allocation2 + $0x28] sm:$0xff]
        %v366 = vld [vmem:[#allocation2 + $0x30] sm:$0xff]
        %v367 = vld [vmem:[#allocation2 + $0x38] sm:$0xff]
        %v368 = vld [vmem:[#allocation2 + $0x40] sm:$0xff]
        %v369 = vld [vmem:[#allocation2 + $0x48] sm:$0xff]
        %380 = vrot.lane.b32.xlu0 %v360, 126
        %v381 = vpop.permute.xlu0 %380
        %382 = vrot.lane.b32.xlu0 %v361, 126
        %v383 = vpop.permute.xlu0 %382
        %384 = vrot.lane.b32.xlu0 %v362, 126
        %v385 = vpop.permute.xlu0 %384
        %386 = vrot.lane.b32.xlu0 %v363, 126
        %v387 = vpop.permute.xlu0 %386
        %388 = vrot.lane.b32.xlu0 %v364, 126
        %v389 = vpop.permute.xlu0 %388
        %390 = vrot.lane.b32.xlu0 %v365, 126
        %v391 = vpop.permute.xlu0 %390
        %392 = vrot.lane.b32.xlu0 %v366, 126
        %v393 = vpop.permute.xlu0 %392
        %394 = vrot.lane.b32.xlu0 %v367, 126
        %v395 = vpop.permute.xlu0 %394
        %396 = vrot.lane.b32.xlu0 %v368, 126
        %v397 = vpop.permute.xlu0 %396
        %398 = vrot.lane.b32.xlu0 %v369, 126
        %v399 = vpop.permute.xlu0 %398
        %vm400 = vcmask 1031168
        %v401 = vsel %vm400, %v381, %v383
        %v402 = vsel %vm400, %v383, %v385
        %v403 = vsel %vm400, %v385, %v387
        %v404 = vsel %vm400, %v387, %v389
        %v405 = vsel %vm400, %v391, %v393
        %v406 = vsel %vm400, %v393, %v395
        %v407 = vsel %vm400, %v395, %v397
        %v408 = vsel %vm400, %v397, %v399
        %409 = vrot.lane.b32.xlu0 %v361, 124
        %v410 = vpop.permute.xlu0 %409
        %411 = vrot.lane.b32.xlu0 %v362, 124
        %v412 = vpop.permute.xlu0 %411
        %413 = vrot.lane.b32.xlu0 %v363, 124
        %v414 = vpop.permute.xlu0 %413
        %415 = vrot.lane.b32.xlu0 %v364, 124
        %v416 = vpop.permute.xlu0 %415
        %417 = vrot.lane.b32.xlu0 %v366, 124
        %v418 = vpop.permute.xlu0 %417
        %419 = vrot.lane.b32.xlu0 %v367, 124
        %v420 = vpop.permute.xlu0 %419
        %421 = vrot.lane.b32.xlu0 %v368, 124
        %v422 = vpop.permute.xlu0 %421
        %423 = vrot.lane.b32.xlu0 %v369, 124
        %v424 = vpop.permute.xlu0 %423
        %vm425 = vcmask 1014784
        %v426 = vsel %vm425, %v410, %v412
        %v427 = vsel %vm425, %v412, %v414
        %v428 = vsel %vm425, %v414, %v416
        %v429 = vsel %vm425, %v418, %v420
        %v430 = vsel %vm425, %v420, %v422
        %v431 = vsel %vm425, %v422, %v424
        %v432 = vld [vmem:[%s1] sm:$0xf]
        %v433 = vld [vmem:[%s1 + $0x4] sm:$0xf]
        %v434 = vld [vmem:[%s1 + $0x8] sm:$0xf]
        %v435 = vld [vmem:[%s1 + $0xc] sm:$0xf]
        %v436 = vld [vmem:[%s1 + $0x10] sm:$0xf]
        %v437 = vld [vmem:[%s1 + $0x14] sm:$0xf]
        %v438 = vld [vmem:[%s1 + $0x18] sm:$0xf]
        %v439 = vld [vmem:[%s1 + $0x1c] sm:$0xf]
        %v440 = vld [vmem:[%s2] sm:$0xff]
        %v441 = vld [vmem:[%s2 + $0x8] sm:$0xff]
        %v442 = vld [vmem:[%s2 + $0x10] sm:$0xff]
        %v443 = vld [vmem:[%s2 + $0x18] sm:$0xff]
        %v444 = vld [vmem:[%s2 + $0x20] sm:$0xff]
        %v445 = vld [vmem:[%s2 + $0x28] sm:$0xff]
        %v446 = vld [vmem:[%s2 + $0x30] sm:$0xff]
        %v447 = vld [vmem:[%s2 + $0x38] sm:$0xff]
        %449 = vset.pattern.permute.xlu0 0
        %450 = vperm.xlu0 %449, %v440
        %v451 = vpop.permute.xlu0 %450
        %454 = vset.pattern.permute.xlu0 0
        %455 = vperm.xlu0 %454, %v441
        %v456 = vpop.permute.xlu0 %455
        %459 = vset.pattern.permute.xlu0 0
        %460 = vperm.xlu0 %459, %v442
        %v461 = vpop.permute.xlu0 %460
        %464 = vset.pattern.permute.xlu0 0
        %465 = vperm.xlu0 %464, %v443
        %v466 = vpop.permute.xlu0 %465
        %469 = vset.pattern.permute.xlu0 0
        %470 = vperm.xlu0 %469, %v444
        %v471 = vpop.permute.xlu0 %470
        %474 = vset.pattern.permute.xlu0 0
        %475 = vperm.xlu0 %474, %v445
        %v476 = vpop.permute.xlu0 %475
        %479 = vset.pattern.permute.xlu0 0
        %480 = vperm.xlu0 %479, %v446
        %v481 = vpop.permute.xlu0 %480
        %484 = vset.pattern.permute.xlu0 0
        %485 = vperm.xlu0 %484, %v447
        %v486 = vpop.permute.xlu0 %485
        %v496 = vunpack.c.l.b16 %v432
        %v497 = vunpack.c.l.b16 %v433
        %v498 = vunpack.c.l.b16 %v434
        %v499 = vunpack.c.l.b16 %v435
        %v500 = vunpack.c.l.b16 %v436
        %v501 = vunpack.c.l.b16 %v437
        %v502 = vunpack.c.l.b16 %v438
        %v503 = vunpack.c.l.b16 %v439
        %v504 = vpack.c.b16 %v497, %v496
        %v505 = vpack.c.b16 %v499, %v498
        %v506 = vpack.c.b16 %v501, %v500
        %v507 = vpack.c.b16 %v503, %v502
        %508 = vrot.lane.b32.xlu0 %v360, 4
        %v509 = vpop.permute.xlu0 %508
        %510 = vrot.lane.b32.xlu0 %v361, 4
        %v511 = vpop.permute.xlu0 %510
        %512 = vrot.lane.b32.xlu0 %v362, 4
        %v513 = vpop.permute.xlu0 %512
        %514 = vrot.lane.b32.xlu0 %v363, 4
        %v515 = vpop.permute.xlu0 %514
        %516 = vrot.lane.b32.xlu0 %v364, 4
        %v517 = vpop.permute.xlu0 %516
        %518 = vrot.lane.b32.xlu0 %v365, 4
        %v519 = vpop.permute.xlu0 %518
        %520 = vrot.lane.b32.xlu0 %v366, 4
        %v521 = vpop.permute.xlu0 %520
        %522 = vrot.lane.b32.xlu0 %v367, 4
        %v523 = vpop.permute.xlu0 %522
        %524 = vrot.lane.b32.xlu0 %v368, 4
        %v525 = vpop.permute.xlu0 %524
        %526 = vrot.lane.b32.xlu0 %v369, 4
        %v527 = vpop.permute.xlu0 %526
        %528 = vrot.lane.b32.xlu0 %v401, 4
        %v529 = vpop.permute.xlu0 %528
        %530 = vrot.lane.b32.xlu0 %v402, 4
        %v531 = vpop.permute.xlu0 %530
        %532 = vrot.lane.b32.xlu0 %v403, 4
        %v533 = vpop.permute.xlu0 %532
        %534 = vrot.lane.b32.xlu0 %v404, 4
        %v535 = vpop.permute.xlu0 %534
        %536 = vrot.lane.b32.xlu0 %v389, 4
        %v537 = vpop.permute.xlu0 %536
        %538 = vrot.lane.b32.xlu0 %v405, 4
        %v539 = vpop.permute.xlu0 %538
        %540 = vrot.lane.b32.xlu0 %v406, 4
        %v541 = vpop.permute.xlu0 %540
        %542 = vrot.lane.b32.xlu0 %v407, 4
        %v543 = vpop.permute.xlu0 %542
        %544 = vrot.lane.b32.xlu0 %v408, 4
        %v545 = vpop.permute.xlu0 %544
        %546 = vrot.lane.b32.xlu0 %v399, 4
        %v547 = vpop.permute.xlu0 %546
        %548 = vrot.lane.b32.xlu0 %v410, 4
        %v549 = vpop.permute.xlu0 %548
        %550 = vrot.lane.b32.xlu0 %v426, 4
        %v551 = vpop.permute.xlu0 %550
        %552 = vrot.lane.b32.xlu0 %v427, 4
        %v553 = vpop.permute.xlu0 %552
        %554 = vrot.lane.b32.xlu0 %v428, 4
        %v555 = vpop.permute.xlu0 %554
        %556 = vrot.lane.b32.xlu0 %v416, 4
        %v557 = vpop.permute.xlu0 %556
        %558 = vrot.lane.b32.xlu0 %v418, 4
        %v559 = vpop.permute.xlu0 %558
        %560 = vrot.lane.b32.xlu0 %v429, 4
        %v561 = vpop.permute.xlu0 %560
        %562 = vrot.lane.b32.xlu0 %v430, 4
        %v563 = vpop.permute.xlu0 %562
        %564 = vrot.lane.b32.xlu0 %v431, 4
        %v565 = vpop.permute.xlu0 %564
        %566 = vrot.lane.b32.xlu0 %v424, 4
        %v567 = vpop.permute.xlu0 %566
        %vm568 = vcmask 31744
        %v569 = vsel %vm568, %v509, %v511
        %v570 = vsel %vm568, %v511, %v513
        %v571 = vsel %vm568, %v513, %v515
        %v572 = vsel %vm568, %v515, %v517
        %v573 = vsel %vm568, %v519, %v521
        %v574 = vsel %vm568, %v521, %v523
        %v575 = vsel %vm568, %v523, %v525
        %v576 = vsel %vm568, %v525, %v527
        %v577 = vsel %vm568, %v529, %v531
        %v578 = vsel %vm568, %v531, %v533
        %v579 = vsel %vm568, %v533, %v535
        %v580 = vsel %vm568, %v535, %v537
        %v581 = vsel %vm568, %v539, %v541
        %v582 = vsel %vm568, %v541, %v543
        %v583 = vsel %vm568, %v543, %v545
        %v584 = vsel %vm568, %v545, %v547
        %v585 = vsel %vm568, %v549, %v551
        %v586 = vsel %vm568, %v551, %v553
        %v587 = vsel %vm568, %v553, %v555
        %v588 = vsel %vm568, %v555, %v557
        %v589 = vsel %vm568, %v559, %v561
        %v590 = vsel %vm568, %v561, %v563
        %v591 = vsel %vm568, %v563, %v565
        %v592 = vsel %vm568, %v565, %v567
        %vm617 = vcmask 785408
        %v619 = vsel %vm617, %v504, 0
        %v622 = vsel %vm617, %v505, 0
        %v625 = vsel %vm617, %v506, 0
        %v628 = vsel %vm617, %v507, 0
        %630 = vmatprep.subr.bf16.mxu0 %v570
        %631 = vmatpush1.bf16.msra.mxu0 %v569
        %632 = vmatprep.subr.bf16.mxu0 %v574
        %633 = vmatpush1.bf16.msra.mxu0 %v573
        %634 = vmatprep.subr.bf16.mxu0 %v578
        %635 = vmatpush1.bf16.msra.mxu0 %v577
        %636 = vmatprep.subr.bf16.mxu0 %v582
        %637 = vmatpush1.bf16.msra.mxu0 %v581
        %638 = vmatprep.subr.bf16.mxu0 %v586
        %639 = vmatpush1.bf16.msra.mxu0 %v585
        %640 = vmatprep.subr.bf16.mxu0 %v590
        %641 = vmatpush1.bf16.msra.mxu0 %v589
        %642 = vmatprep.subr.bf16.mxu0 0
        %643 = vmatpush1.bf16.msra.mxu0 0
        %644 = vmatprep.subr.bf16.mxu0 0
        %645 = vmatpush1.bf16.msra.mxu0 0
        %646 = vmatprep.subr.bf16.mxu0 0
        %647 = vmatpush1.bf16.msra.mxu0 0
        %648 = vmatprep.subr.bf16.mxu0 0
        %649 = vmatpush1.bf16.msra.mxu0 0
        %650 = vmatprep.subr.bf16.mxu0 0
        %651 = vmatpush1.bf16.msra.mxu0 0
        %652 = vmatprep.subr.bf16.mxu0 0
        %653 = vmatpush1.bf16.msra.mxu0 0
        %654 = vmatprep.subr.bf16.mxu0 0
        %655 = vmatpush1.bf16.msra.mxu0 0
        %656 = vmatprep.subr.bf16.mxu0 0
        %657 = vmatpush1.bf16.msra.mxu0 0
        %658 = vmatprep.subr.bf16.mxu0 0
        %659 = vmatpush1.bf16.msra.mxu0 0
        %660 = vmatprep.subr.bf16.mxu0 0
        %661 = vmatpush1.bf16.msra.mxu0 0
        %662 = vmatprep.mubr.bf16.mxu0 0
        %663 = vmatmul.mubr.bf16.gmra.mrb[0].mxu0 %v619
        %v664 = vpop.f32.mrb[0].mxu0
        %v665 = vadd.f32 %v451, %v664
        %v666 = vpop.f32.mrb[0].mxu0
        %v667 = vadd.f32 %v451, %v666
        %v668 = vpop.f32.mrb[0].mxu0
        %v669 = vadd.f32 %v456, %v668
        %v670 = vpop.f32.mrb[0].mxu0
        %v671 = vadd.f32 %v456, %v670
        %672 = vmatprep.mubr.bf16.mxu0 0
        %673 = vmatmul.mubr.bf16.gmra.mrb[0].mxu0 %v622
        %v674 = vpop.f32.mrb[0].mxu0
        %v675 = vadd.f32 %v461, %v674
        %v676 = vpop.f32.mrb[0].mxu0
        %v677 = vadd.f32 %v461, %v676
        %v678 = vpop.f32.mrb[0].mxu0
        %v679 = vadd.f32 %v466, %v678
        %v680 = vpop.f32.mrb[0].mxu0
        %v681 = vadd.f32 %v466, %v680
        %682 = vmatprep.mubr.bf16.mxu0 0
        %683 = vmatmul.mubr.bf16.gmra.mrb[0].mxu0 %v625
        %v684 = vpop.f32.mrb[0].mxu0
        %v685 = vadd.f32 %v471, %v684
        %v686 = vpop.f32.mrb[0].mxu0
        %v687 = vadd.f32 %v471, %v686
        %v688 = vpop.f32.mrb[0].mxu0
        %v689 = vadd.f32 %v476, %v688
        %v690 = vpop.f32.mrb[0].mxu0
        %v691 = vadd.f32 %v476, %v690
        %692 = vmatprep.mubr.bf16.mxu0 0
        %693 = vmatmul.mubr.bf16.gmra.mrb[0].mxu0 %v628
        %v694 = vpop.f32.mrb[0].mxu0
        %v695 = vadd.f32 %v481, %v694
        %v696 = vpop.f32.mrb[0].mxu0
        %v697 = vadd.f32 %v481, %v696
        %v698 = vpop.f32.mrb[0].mxu0
        %v699 = vadd.f32 %v486, %v698
        %v700 = vpop.f32.mrb[0].mxu0
        %v701 = vadd.f32 %v486, %v700
        %702 = vdwg.mxu0
        %703 = vmatprep.subr.bf16.mxu0 %v572
        %704 = vmatpush1.bf16.msra.mxu0 %v571
        %705 = vmatprep.subr.bf16.mxu0 %v576
        %706 = vmatpush1.bf16.msra.mxu0 %v575
        %707 = vmatprep.subr.bf16.mxu0 %v580
        %708 = vmatpush1.bf16.msra.mxu0 %v579
        %709 = vmatprep.subr.bf16.mxu0 %v584
        %710 = vmatpush1.bf16.msra.mxu0 %v583
        %711 = vmatprep.subr.bf16.mxu0 %v588
        %712 = vmatpush1.bf16.msra.mxu0 %v587
        %713 = vmatprep.subr.bf16.mxu0 %v592
        %714 = vmatpush1.bf16.msra.mxu0 %v591
        %715 = vmatprep.subr.bf16.mxu0 0
        %716 = vmatpush1.bf16.msra.mxu0 0
        %717 = vmatprep.subr.bf16.mxu0 0
        %718 = vmatpush1.bf16.msra.mxu0 0
        %719 = vmatprep.subr.bf16.mxu0 0
        %720 = vmatpush1.bf16.msra.mxu0 0
        %721 = vmatprep.subr.bf16.mxu0 0
        %722 = vmatpush1.bf16.msra.mxu0 0
        %723 = vmatprep.subr.bf16.mxu0 0
        %724 = vmatpush1.bf16.msra.mxu0 0
        %725 = vmatprep.subr.bf16.mxu0 0
        %726 = vmatpush1.bf16.msra.mxu0 0
        %727 = vmatprep.subr.bf16.mxu0 0
        %728 = vmatpush1.bf16.msra.mxu0 0
        %729 = vmatprep.subr.bf16.mxu0 0
        %730 = vmatpush1.bf16.msra.mxu0 0
        %731 = vmatprep.subr.bf16.mxu0 0
        %732 = vmatpush1.bf16.msra.mxu0 0
        %733 = vmatprep.subr.bf16.mxu0 0
        %734 = vmatpush1.bf16.msra.mxu0 0
        %735 = vmatprep.mubr.bf16.mxu0 0
        %736 = vmatmul.mubr.bf16.gmra.mrb[0].mxu0 %v619
        %v737 = vpop.f32.mrb[0].mxu0
        %v738 = vadd.f32 %v451, %v737
        %v739 = vpop.f32.mrb[0].mxu0
        %v740 = vadd.f32 %v451, %v739
        %v741 = vpop.f32.mrb[0].mxu0
        %v742 = vadd.f32 %v456, %v741
        %v743 = vpop.f32.mrb[0].mxu0
        %v744 = vadd.f32 %v456, %v743
        %745 = vmatprep.mubr.bf16.mxu0 0
        %746 = vmatmul.mubr.bf16.gmra.mrb[0].mxu0 %v622
        %v747 = vpop.f32.mrb[0].mxu0
        %v748 = vadd.f32 %v461, %v747
        %v749 = vpop.f32.mrb[0].mxu0
        %v750 = vadd.f32 %v461, %v749
        %v751 = vpop.f32.mrb[0].mxu0
        %v752 = vadd.f32 %v466, %v751
        %v753 = vpop.f32.mrb[0].mxu0
        %v754 = vadd.f32 %v466, %v753
        %755 = vmatprep.mubr.bf16.mxu0 0
        %756 = vmatmul.mubr.bf16.gmra.mrb[0].mxu0 %v625
        %v757 = vpop.f32.mrb[0].mxu0
        %v758 = vadd.f32 %v471, %v757
        %v759 = vpop.f32.mrb[0].mxu0
        %v760 = vadd.f32 %v471, %v759
        %v761 = vpop.f32.mrb[0].mxu0
        %v762 = vadd.f32 %v476, %v761
        %v763 = vpop.f32.mrb[0].mxu0
        %v764 = vadd.f32 %v476, %v763
        %765 = vmatprep.mubr.bf16.mxu0 0
        %766 = vmatmul.mubr.bf16.gmra.mrb[0].mxu0 %v628
        %v767 = vpop.f32.mrb[0].mxu0
        %v768 = vadd.f32 %v481, %v767
        %v769 = vpop.f32.mrb[0].mxu0
        %v770 = vadd.f32 %v481, %v769
        %v771 = vpop.f32.mrb[0].mxu0
        %v772 = vadd.f32 %v486, %v771
        %v773 = vpop.f32.mrb[0].mxu0
        %v774 = vadd.f32 %v486, %v773
        %775 = vdwg.mxu0
        %v776 = vmax.f32 %v665, 0.0
        %v777 = vmax.f32 %v667, 0.0
        %v778 = vmax.f32 %v738, 0.0
        %v779 = vmax.f32 %v740, 0.0
        %v780 = vmax.f32 %v669, 0.0
        %v781 = vmax.f32 %v671, 0.0
        %v782 = vmax.f32 %v742, 0.0
        %v783 = vmax.f32 %v744, 0.0
        %v784 = vmax.f32 %v675, 0.0
        %v785 = vmax.f32 %v677, 0.0
        %v786 = vmax.f32 %v748, 0.0
        %v787 = vmax.f32 %v750, 0.0
        %v788 = vmax.f32 %v679, 0.0
        %v789 = vmax.f32 %v681, 0.0
        %v790 = vmax.f32 %v752, 0.0
        %v791 = vmax.f32 %v754, 0.0
        %v792 = vmax.f32 %v685, 0.0
        %v793 = vmax.f32 %v687, 0.0
        %v794 = vmax.f32 %v758, 0.0
        %v795 = vmax.f32 %v760, 0.0
        %v796 = vmax.f32 %v689, 0.0
        %v797 = vmax.f32 %v691, 0.0
        %v798 = vmax.f32 %v762, 0.0
        %v799 = vmax.f32 %v764, 0.0
        %v800 = vmax.f32 %v695, 0.0
        %v801 = vmax.f32 %v697, 0.0
        %v802 = vmax.f32 %v768, 0.0
        %v803 = vmax.f32 %v770, 0.0
        %v804 = vmax.f32 %v699, 0.0
        %v805 = vmax.f32 %v701, 0.0
        %v806 = vmax.f32 %v772, 0.0
        %v807 = vmax.f32 %v774, 0.0
        %v808 = vpack.c.bf16 %v780, %v776
        %v809 = vpack.c.bf16 %v781, %v777
        %v810 = vpack.c.bf16 %v782, %v778
        %v811 = vpack.c.bf16 %v783, %v779
        %v812 = vpack.c.bf16 %v788, %v784
        %v813 = vpack.c.bf16 %v789, %v785
        %v814 = vpack.c.bf16 %v790, %v786
        %v815 = vpack.c.bf16 %v791, %v787
        %v816 = vpack.c.bf16 %v796, %v792
        %v817 = vpack.c.bf16 %v797, %v793
        %v818 = vpack.c.bf16 %v798, %v794
        %v819 = vpack.c.bf16 %v799, %v795
        %v820 = vpack.c.bf16 %v804, %v800
        %v821 = vpack.c.bf16 %v805, %v801
        %v822 = vpack.c.bf16 %v806, %v802
        %v823 = vpack.c.bf16 %v807, %v803
        %824 = vst [vmem:[#allocation3 + $0x8] sm:$0xff] %v808
        %825 = vst [vmem:[#allocation3 + $0x10] sm:$0xff] %v809
        %826 = vst [vmem:[#allocation3 + $0x18] sm:$0xff] %v810
        %827 = vst [vmem:[#allocation3 + $0x20] sm:$0xff] %v811
        %828 = vst [vmem:[#allocation3 + $0x30] sm:$0xff] %v812
        %829 = vst [vmem:[#allocation3 + $0x38] sm:$0xff] %v813
        %830 = vst [vmem:[#allocation3 + $0x40] sm:$0xff] %v814
        %831 = vst [vmem:[#allocation3 + $0x48] sm:$0xff] %v815
        %832 = vst [vmem:[#allocation3 + $0x58] sm:$0xff] %v816
        %833 = vst [vmem:[#allocation3 + $0x60] sm:$0xff] %v817
        %834 = vst [vmem:[#allocation3 + $0x68] sm:$0xff] %v818
        %835 = vst [vmem:[#allocation3 + $0x70] sm:$0xff] %v819
        %836 = vst [vmem:[#allocation3 + $0x80] sm:$0xff] %v820
        %837 = vst [vmem:[#allocation3 + $0x88] sm:$0xff] %v821
        %838 = vst [vmem:[#allocation3 + $0x90] sm:$0xff] %v822
        %839 = vst [vmem:[#allocation3 + $0x98] sm:$0xff] %v823
        %v840 = vld [vmem:[#allocation3] sm:$0xff]
        %v841 = vld [vmem:[#allocation3 + $0x8] sm:$0xff]
        %v842 = vld [vmem:[#allocation3 + $0x10] sm:$0xff]
        %v843 = vld [vmem:[#allocation3 + $0x18] sm:$0xff]
        %v844 = vld [vmem:[#allocation3 + $0x20] sm:$0xff]
        %v845 = vld [vmem:[#allocation3 + $0x28] sm:$0xff]
        %v846 = vld [vmem:[#allocation3 + $0x30] sm:$0xff]
        %v847 = vld [vmem:[#allocation3 + $0x38] sm:$0xff]
        %v848 = vld [vmem:[#allocation3 + $0x40] sm:$0xff]
        %v849 = vld [vmem:[#allocation3 + $0x48] sm:$0xff]
        %v850 = vld [vmem:[#allocation3 + $0x50] sm:$0xff]
        %v851 = vld [vmem:[#allocation3 + $0x58] sm:$0xff]
        %v852 = vld [vmem:[#allocation3 + $0x60] sm:$0xff]
        %v853 = vld [vmem:[#allocation3 + $0x68] sm:$0xff]
        %v854 = vld [vmem:[#allocation3 + $0x70] sm:$0xff]
        %v855 = vld [vmem:[#allocation3 + $0x78] sm:$0xff]
        %v856 = vld [vmem:[#allocation3 + $0x80] sm:$0xff]
        %v857 = vld [vmem:[#allocation3 + $0x88] sm:$0xff]
        %v858 = vld [vmem:[#allocation3 + $0x90] sm:$0xff]
        %v859 = vld [vmem:[#allocation3 + $0x98] sm:$0xff]
        %880 = vrot.lane.b32.xlu0 %v840, 126
        %v881 = vpop.permute.xlu0 %880
        %882 = vrot.lane.b32.xlu0 %v841, 126
        %v883 = vpop.permute.xlu0 %882
        %884 = vrot.lane.b32.xlu0 %v842, 126
        %v885 = vpop.permute.xlu0 %884
        %886 = vrot.lane.b32.xlu0 %v843, 126
        %v887 = vpop.permute.xlu0 %886
        %888 = vrot.lane.b32.xlu0 %v844, 126
        %v889 = vpop.permute.xlu0 %888
        %890 = vrot.lane.b32.xlu0 %v845, 126
        %v891 = vpop.permute.xlu0 %890
        %892 = vrot.lane.b32.xlu0 %v846, 126
        %v893 = vpop.permute.xlu0 %892
        %894 = vrot.lane.b32.xlu0 %v847, 126
        %v895 = vpop.permute.xlu0 %894
        %896 = vrot.lane.b32.xlu0 %v848, 126
        %v897 = vpop.permute.xlu0 %896
        %898 = vrot.lane.b32.xlu0 %v849, 126
        %v899 = vpop.permute.xlu0 %898
        %900 = vrot.lane.b32.xlu0 %v850, 126
        %v901 = vpop.permute.xlu0 %900
        %902 = vrot.lane.b32.xlu0 %v851, 126
        %v903 = vpop.permute.xlu0 %902
        %904 = vrot.lane.b32.xlu0 %v852, 126
        %v905 = vpop.permute.xlu0 %904
        %906 = vrot.lane.b32.xlu0 %v853, 126
        %v907 = vpop.permute.xlu0 %906
        %908 = vrot.lane.b32.xlu0 %v854, 126
        %v909 = vpop.permute.xlu0 %908
        %910 = vrot.lane.b32.xlu0 %v855, 126
        %v911 = vpop.permute.xlu0 %910
        %912 = vrot.lane.b32.xlu0 %v856, 126
        %v913 = vpop.permute.xlu0 %912
        %914 = vrot.lane.b32.xlu0 %v857, 126
        %v915 = vpop.permute.xlu0 %914
        %916 = vrot.lane.b32.xlu0 %v858, 126
        %v917 = vpop.permute.xlu0 %916
        %918 = vrot.lane.b32.xlu0 %v859, 126
        %v919 = vpop.permute.xlu0 %918
        %v920 = vsel %vm400, %v881, %v883
        %v921 = vsel %vm400, %v883, %v885
        %v922 = vsel %vm400, %v885, %v887
        %v923 = vsel %vm400, %v887, %v889
        %v924 = vsel %vm400, %v891, %v893
        %v925 = vsel %vm400, %v893, %v895
        %v926 = vsel %vm400, %v895, %v897
        %v927 = vsel %vm400, %v897, %v899
        %v928 = vsel %vm400, %v901, %v903
        %v929 = vsel %vm400, %v903, %v905
        %v930 = vsel %vm400, %v905, %v907
        %v931 = vsel %vm400, %v907, %v909
        %v932 = vsel %vm400, %v911, %v913
        %v933 = vsel %vm400, %v913, %v915
        %v934 = vsel %vm400, %v915, %v917
        %v935 = vsel %vm400, %v917, %v919
        %936 = vrot.lane.b32.xlu0 %v841, 124
        %v937 = vpop.permute.xlu0 %936
        %938 = vrot.lane.b32.xlu0 %v842, 124
        %v939 = vpop.permute.xlu0 %938
        %940 = vrot.lane.b32.xlu0 %v843, 124
        %v941 = vpop.permute.xlu0 %940
        %942 = vrot.lane.b32.xlu0 %v844, 124
        %v943 = vpop.permute.xlu0 %942
        %944 = vrot.lane.b32.xlu0 %v846, 124
        %v945 = vpop.permute.xlu0 %944
        %946 = vrot.lane.b32.xlu0 %v847, 124
        %v947 = vpop.permute.xlu0 %946
        %948 = vrot.lane.b32.xlu0 %v848, 124
        %v949 = vpop.permute.xlu0 %948
        %950 = vrot.lane.b32.xlu0 %v849, 124
        %v951 = vpop.permute.xlu0 %950
        %952 = vrot.lane.b32.xlu0 %v851, 124
        %v953 = vpop.permute.xlu0 %952
        %954 = vrot.lane.b32.xlu0 %v852, 124
        %v955 = vpop.permute.xlu0 %954
        %956 = vrot.lane.b32.xlu0 %v853, 124
        %v957 = vpop.permute.xlu0 %956
        %958 = vrot.lane.b32.xlu0 %v854, 124
        %v959 = vpop.permute.xlu0 %958
        %960 = vrot.lane.b32.xlu0 %v856, 124
        %v961 = vpop.permute.xlu0 %960
        %962 = vrot.lane.b32.xlu0 %v857, 124
        %v963 = vpop.permute.xlu0 %962
        %964 = vrot.lane.b32.xlu0 %v858, 124
        %v965 = vpop.permute.xlu0 %964
        %966 = vrot.lane.b32.xlu0 %v859, 124
        %v967 = vpop.permute.xlu0 %966
        %v968 = vsel %vm425, %v937, %v939
        %v969 = vsel %vm425, %v939, %v941
        %v970 = vsel %vm425, %v941, %v943
        %v971 = vsel %vm425, %v945, %v947
        %v972 = vsel %vm425, %v947, %v949
        %v973 = vsel %vm425, %v949, %v951
        %v974 = vsel %vm425, %v953, %v955
        %v975 = vsel %vm425, %v955, %v957
        %v976 = vsel %vm425, %v957, %v959
        %v977 = vsel %vm425, %v961, %v963
        %v978 = vsel %vm425, %v963, %v965
        %v979 = vsel %vm425, %v965, %v967
        %v980 = vld [vmem:[%s3] sm:$0xff]
        %v981 = vld [vmem:[%s3 + $0x8] sm:$0xff]
        %v982 = vld [vmem:[%s3 + $0x10] sm:$0xff]
        %v983 = vld [vmem:[%s3 + $0x18] sm:$0xff]
        %v984 = vld [vmem:[%s3 + $0x20] sm:$0xff]
        %v985 = vld [vmem:[%s3 + $0x28] sm:$0xff]
        %v986 = vld [vmem:[%s3 + $0x30] sm:$0xff]
        %v987 = vld [vmem:[%s3 + $0x38] sm:$0xff]
        %v988 = vld [vmem:[%s4] sm:$0xff]
        %v989 = vld [vmem:[%s4 + $0x8] sm:$0xff]
        %v990 = vld [vmem:[%s4 + $0x10] sm:$0xff]
        %v991 = vld [vmem:[%s4 + $0x18] sm:$0xff]
        %v992 = vld [vmem:[%s4 + $0x20] sm:$0xff]
        %v993 = vld [vmem:[%s4 + $0x28] sm:$0xff]
        %v994 = vld [vmem:[%s4 + $0x30] sm:$0xff]
        %v995 = vld [vmem:[%s4 + $0x38] sm:$0xff]
        %997 = vset.pattern.permute.xlu0 0
        %998 = vperm.xlu0 %997, %v988
        %v999 = vpop.permute.xlu0 %998
        %1002 = vset.pattern.permute.xlu0 0
        %1003 = vperm.xlu0 %1002, %v989
        %v1004 = vpop.permute.xlu0 %1003
        %1007 = vset.pattern.permute.xlu0 0
        %1008 = vperm.xlu0 %1007, %v990
        %v1009 = vpop.permute.xlu0 %1008
        %1012 = vset.pattern.permute.xlu0 0
        %1013 = vperm.xlu0 %1012, %v991
        %v1014 = vpop.permute.xlu0 %1013
        %1017 = vset.pattern.permute.xlu0 0
        %1018 = vperm.xlu0 %1017, %v992
        %v1019 = vpop.permute.xlu0 %1018
        %1022 = vset.pattern.permute.xlu0 0
        %1023 = vperm.xlu0 %1022, %v993
        %v1024 = vpop.permute.xlu0 %1023
        %1027 = vset.pattern.permute.xlu0 0
        %1028 = vperm.xlu0 %1027, %v994
        %v1029 = vpop.permute.xlu0 %1028
        %1032 = vset.pattern.permute.xlu0 0
        %1033 = vperm.xlu0 %1032, %v995
        %v1034 = vpop.permute.xlu0 %1033
        %v1044 = vunpack.c.l.b16 %v980
        %v1045 = vunpack.c.h.b16 %v980
        %v1046 = vunpack.c.l.b16 %v981
        %v1047 = vunpack.c.h.b16 %v981
        %v1048 = vunpack.c.l.b16 %v982
        %v1049 = vunpack.c.h.b16 %v982
        %v1050 = vunpack.c.l.b16 %v983
        %v1051 = vunpack.c.h.b16 %v983
        %v1052 = vunpack.c.l.b16 %v984
        %v1053 = vunpack.c.h.b16 %v984
        %v1054 = vunpack.c.l.b16 %v985
        %v1055 = vunpack.c.h.b16 %v985
        %v1056 = vunpack.c.l.b16 %v986
        %v1057 = vunpack.c.h.b16 %v986
        %v1058 = vunpack.c.l.b16 %v987
        %v1059 = vunpack.c.h.b16 %v987
        %v1060 = vpack.c.b16 %v1046, %v1044
        %v1061 = vpack.c.b16 %v1047, %v1045
        %v1062 = vpack.c.b16 %v1050, %v1048
        %v1063 = vpack.c.b16 %v1051, %v1049
        %v1064 = vpack.c.b16 %v1054, %v1052
        %v1065 = vpack.c.b16 %v1055, %v1053
        %v1066 = vpack.c.b16 %v1058, %v1056
        %v1067 = vpack.c.b16 %v1059, %v1057
        %1072 = vrot.lane.b32.xlu0 %v840, 4
        %v1073 = vpop.permute.xlu0 %1072
        %1074 = vrot.lane.b32.xlu0 %v841, 4
        %v1075 = vpop.permute.xlu0 %1074
        %1076 = vrot.lane.b32.xlu0 %v842, 4
        %v1077 = vpop.permute.xlu0 %1076
        %1078 = vrot.lane.b32.xlu0 %v843, 4
        %v1079 = vpop.permute.xlu0 %1078
        %1080 = vrot.lane.b32.xlu0 %v844, 4
        %v1081 = vpop.permute.xlu0 %1080
        %1082 = vrot.lane.b32.xlu0 %v845, 4
        %v1083 = vpop.permute.xlu0 %1082
        %1084 = vrot.lane.b32.xlu0 %v846, 4
        %v1085 = vpop.permute.xlu0 %1084
        %1086 = vrot.lane.b32.xlu0 %v847, 4
        %v1087 = vpop.permute.xlu0 %1086
        %1088 = vrot.lane.b32.xlu0 %v848, 4
        %v1089 = vpop.permute.xlu0 %1088
        %1090 = vrot.lane.b32.xlu0 %v849, 4
        %v1091 = vpop.permute.xlu0 %1090
        %1092 = vrot.lane.b32.xlu0 %v850, 4
        %v1093 = vpop.permute.xlu0 %1092
        %1094 = vrot.lane.b32.xlu0 %v851, 4
        %v1095 = vpop.permute.xlu0 %1094
        %1096 = vrot.lane.b32.xlu0 %v852, 4
        %v1097 = vpop.permute.xlu0 %1096
        %1098 = vrot.lane.b32.xlu0 %v853, 4
        %v1099 = vpop.permute.xlu0 %1098
        %1100 = vrot.lane.b32.xlu0 %v854, 4
        %v1101 = vpop.permute.xlu0 %1100
        %1102 = vrot.lane.b32.xlu0 %v855, 4
        %v1103 = vpop.permute.xlu0 %1102
        %1104 = vrot.lane.b32.xlu0 %v856, 4
        %v1105 = vpop.permute.xlu0 %1104
        %1106 = vrot.lane.b32.xlu0 %v857, 4
        %v1107 = vpop.permute.xlu0 %1106
        %1108 = vrot.lane.b32.xlu0 %v858, 4
        %v1109 = vpop.permute.xlu0 %1108
        %1110 = vrot.lane.b32.xlu0 %v859, 4
        %v1111 = vpop.permute.xlu0 %1110
        %1112 = vrot.lane.b32.xlu0 %v920, 4
        %v1113 = vpop.permute.xlu0 %1112
        %1114 = vrot.lane.b32.xlu0 %v921, 4
        %v1115 = vpop.permute.xlu0 %1114
        %1116 = vrot.lane.b32.xlu0 %v922, 4
        %v1117 = vpop.permute.xlu0 %1116
        %1118 = vrot.lane.b32.xlu0 %v923, 4
        %v1119 = vpop.permute.xlu0 %1118
        %1120 = vrot.lane.b32.xlu0 %v889, 4
        %v1121 = vpop.permute.xlu0 %1120
        %1122 = vrot.lane.b32.xlu0 %v924, 4
        %v1123 = vpop.permute.xlu0 %1122
        %1124 = vrot.lane.b32.xlu0 %v925, 4
        %v1125 = vpop.permute.xlu0 %1124
        %1126 = vrot.lane.b32.xlu0 %v926, 4
        %v1127 = vpop.permute.xlu0 %1126
        %1128 = vrot.lane.b32.xlu0 %v927, 4
        %v1129 = vpop.permute.xlu0 %1128
        %1130 = vrot.lane.b32.xlu0 %v899, 4
        %v1131 = vpop.permute.xlu0 %1130
        %1132 = vrot.lane.b32.xlu0 %v928, 4
        %v1133 = vpop.permute.xlu0 %1132
        %1134 = vrot.lane.b32.xlu0 %v929, 4
        %v1135 = vpop.permute.xlu0 %1134
        %1136 = vrot.lane.b32.xlu0 %v930, 4
        %v1137 = vpop.permute.xlu0 %1136
        %1138 = vrot.lane.b32.xlu0 %v931, 4
        %v1139 = vpop.permute.xlu0 %1138
        %1140 = vrot.lane.b32.xlu0 %v909, 4
        %v1141 = vpop.permute.xlu0 %1140
        %1142 = vrot.lane.b32.xlu0 %v932, 4
        %v1143 = vpop.permute.xlu0 %1142
        %1144 = vrot.lane.b32.xlu0 %v933, 4
        %v1145 = vpop.permute.xlu0 %1144
        %1146 = vrot.lane.b32.xlu0 %v934, 4
        %v1147 = vpop.permute.xlu0 %1146
        %1148 = vrot.lane.b32.xlu0 %v935, 4
        %v1149 = vpop.permute.xlu0 %1148
        %1150 = vrot.lane.b32.xlu0 %v919, 4
        %v1151 = vpop.permute.xlu0 %1150
        %1152 = vrot.lane.b32.xlu0 %v937, 4
        %v1153 = vpop.permute.xlu0 %1152
        %1154 = vrot.lane.b32.xlu0 %v968, 4
        %v1155 = vpop.permute.xlu0 %1154
        %1156 = vrot.lane.b32.xlu0 %v969, 4
        %v1157 = vpop.permute.xlu0 %1156
        %1158 = vrot.lane.b32.xlu0 %v970, 4
        %v1159 = vpop.permute.xlu0 %1158
        %1160 = vrot.lane.b32.xlu0 %v943, 4
        %v1161 = vpop.permute.xlu0 %1160
        %1162 = vrot.lane.b32.xlu0 %v945, 4
        %v1163 = vpop.permute.xlu0 %1162
        %1164 = vrot.lane.b32.xlu0 %v971, 4
        %v1165 = vpop.permute.xlu0 %1164
        %1166 = vrot.lane.b32.xlu0 %v972, 4
        %v1167 = vpop.permute.xlu0 %1166
        %1168 = vrot.lane.b32.xlu0 %v973, 4
        %v1169 = vpop.permute.xlu0 %1168
        %1170 = vrot.lane.b32.xlu0 %v951, 4
        %v1171 = vpop.permute.xlu0 %1170
        %1172 = vrot.lane.b32.xlu0 %v953, 4
        %v1173 = vpop.permute.xlu0 %1172
        %1174 = vrot.lane.b32.xlu0 %v974, 4
        %v1175 = vpop.permute.xlu0 %1174
        %1176 = vrot.lane.b32.xlu0 %v975, 4
        %v1177 = vpop.permute.xlu0 %1176
        %1178 = vrot.lane.b32.xlu0 %v976, 4
        %v1179 = vpop.permute.xlu0 %1178
        %1180 = vrot.lane.b32.xlu0 %v959, 4
        %v1181 = vpop.permute.xlu0 %1180
        %1182 = vrot.lane.b32.xlu0 %v961, 4
        %v1183 = vpop.permute.xlu0 %1182
        %1184 = vrot.lane.b32.xlu0 %v977, 4
        %v1185 = vpop.permute.xlu0 %1184
        %1186 = vrot.lane.b32.xlu0 %v978, 4
        %v1187 = vpop.permute.xlu0 %1186
        %1188 = vrot.lane.b32.xlu0 %v979, 4
        %v1189 = vpop.permute.xlu0 %1188
        %1190 = vrot.lane.b32.xlu0 %v967, 4
        %v1191 = vpop.permute.xlu0 %1190
        %v1192 = vsel %vm568, %v1073, %v1075
        %v1193 = vsel %vm568, %v1075, %v1077
        %v1194 = vsel %vm568, %v1077, %v1079
        %v1195 = vsel %vm568, %v1079, %v1081
        %v1196 = vsel %vm568, %v1083, %v1085
        %v1197 = vsel %vm568, %v1085, %v1087
        %v1198 = vsel %vm568, %v1087, %v1089
        %v1199 = vsel %vm568, %v1089, %v1091
        %v1200 = vsel %vm568, %v1093, %v1095
        %v1201 = vsel %vm568, %v1095, %v1097
        %v1202 = vsel %vm568, %v1097, %v1099
        %v1203 = vsel %vm568, %v1099, %v1101
        %v1204 = vsel %vm568, %v1103, %v1105
        %v1205 = vsel %vm568, %v1105, %v1107
        %v1206 = vsel %vm568, %v1107, %v1109
        %v1207 = vsel %vm568, %v1109, %v1111
        %v1208 = vsel %vm568, %v1113, %v1115
        %v1209 = vsel %vm568, %v1115, %v1117
        %v1210 = vsel %vm568, %v1117, %v1119
        %v1211 = vsel %vm568, %v1119, %v1121
        %v1212 = vsel %vm568, %v1123, %v1125
        %v1213 = vsel %vm568, %v1125, %v1127
        %v1214 = vsel %vm568, %v1127, %v1129
        %v1215 = vsel %vm568, %v1129, %v1131
        %v1216 = vsel %vm568, %v1133, %v1135
        %v1217 = vsel %vm568, %v1135, %v1137
        %v1218 = vsel %vm568, %v1137, %v1139
        %v1219 = vsel %vm568, %v1139, %v1141
        %v1220 = vsel %vm568, %v1143, %v1145
        %v1221 = vsel %vm568, %v1145, %v1147
        %v1222 = vsel %vm568, %v1147, %v1149
        %v1223 = vsel %vm568, %v1149, %v1151
        %v1224 = vsel %vm568, %v1153, %v1155
        %v1225 = vsel %vm568, %v1155, %v1157
        %v1226 = vsel %vm568, %v1157, %v1159
        %v1227 = vsel %vm568, %v1159, %v1161
        %v1228 = vsel %vm568, %v1163, %v1165
        %v1229 = vsel %vm568, %v1165, %v1167
        %v1230 = vsel %vm568, %v1167, %v1169
        %v1231 = vsel %vm568, %v1169, %v1171
        %v1232 = vsel %vm568, %v1173, %v1175
        %v1233 = vsel %vm568, %v1175, %v1177
        %v1234 = vsel %vm568, %v1177, %v1179
        %v1235 = vsel %vm568, %v1179, %v1181
        %v1236 = vsel %vm568, %v1183, %v1185
        %v1237 = vsel %vm568, %v1185, %v1187
        %v1238 = vsel %vm568, %v1187, %v1189
        %v1239 = vsel %vm568, %v1189, %v1191
        %vm1288 = vcmask 523264
        %v1290 = vsel %vm1288, %v1061, 0
        %v1293 = vsel %vm1288, %v1063, 0
        %v1296 = vsel %vm1288, %v1065, 0
        %v1299 = vsel %vm1288, %v1067, 0
        %1301 = vmatprep.subr.bf16.mxu0 %v1193
        %1302 = vmatpush1.bf16.msra.mxu0 %v1192
        %1303 = vmatprep.subr.bf16.mxu0 %v1197
        %1304 = vmatpush1.bf16.msra.mxu0 %v1196
        %1305 = vmatprep.subr.bf16.mxu0 %v1201
        %1306 = vmatpush1.bf16.msra.mxu0 %v1200
        %1307 = vmatprep.subr.bf16.mxu0 %v1205
        %1308 = vmatpush1.bf16.msra.mxu0 %v1204
        %1309 = vmatprep.subr.bf16.mxu0 %v1209
        %1310 = vmatpush1.bf16.msra.mxu0 %v1208
        %1311 = vmatprep.subr.bf16.mxu0 %v1213
        %1312 = vmatpush1.bf16.msra.mxu0 %v1212
        %1313 = vmatprep.subr.bf16.mxu0 %v1217
        %1314 = vmatpush1.bf16.msra.mxu0 %v1216
        %1315 = vmatprep.subr.bf16.mxu0 %v1221
        %1316 = vmatpush1.bf16.msra.mxu0 %v1220
        %1317 = vmatprep.subr.bf16.mxu0 %v1225
        %1318 = vmatpush1.bf16.msra.mxu0 %v1224
        %1319 = vmatprep.subr.bf16.mxu0 %v1229
        %1320 = vmatpush1.bf16.msra.mxu0 %v1228
        %1321 = vmatprep.subr.bf16.mxu0 %v1233
        %1322 = vmatpush1.bf16.msra.mxu0 %v1232
        %1323 = vmatprep.subr.bf16.mxu0 %v1237
        %1324 = vmatpush1.bf16.msra.mxu0 %v1236
        %1325 = vmatprep.subr.bf16.mxu0 0
        %1326 = vmatpush1.bf16.msra.mxu0 0
        %1327 = vmatprep.subr.bf16.mxu0 0
        %1328 = vmatpush1.bf16.msra.mxu0 0
        %1329 = vmatprep.subr.bf16.mxu0 0
        %1330 = vmatpush1.bf16.msra.mxu0 0
        %1331 = vmatprep.subr.bf16.mxu0 0
        %1332 = vmatpush1.bf16.msra.mxu0 0
        %1333 = vmatprep.mubr.bf16.mxu0 %v1290
        %1334 = vmatmul.mubr.bf16.gmra.mrb[0].mxu0 %v1060
        %v1335 = vpop.f32.mrb[0].mxu0
        %v1336 = vadd.f32 %v999, %v1335
        %v1337 = vpop.f32.mrb[0].mxu0
        %v1338 = vadd.f32 %v999, %v1337
        %v1339 = vpop.f32.mrb[0].mxu0
        %v1340 = vadd.f32 %v1004, %v1339
        %v1341 = vpop.f32.mrb[0].mxu0
        %v1342 = vadd.f32 %v1004, %v1341
        %1343 = vmatprep.mubr.bf16.mxu0 %v1293
        %1344 = vmatmul.mubr.bf16.gmra.mrb[0].mxu0 %v1062
        %v1345 = vpop.f32.mrb[0].mxu0
        %v1346 = vadd.f32 %v1009, %v1345
        %v1347 = vpop.f32.mrb[0].mxu0
        %v1348 = vadd.f32 %v1009, %v1347
        %v1349 = vpop.f32.mrb[0].mxu0
        %v1350 = vadd.f32 %v1014, %v1349
        %v1351 = vpop.f32.mrb[0].mxu0
        %v1352 = vadd.f32 %v1014, %v1351
        %1353 = vmatprep.mubr.bf16.mxu0 %v1296
        %1354 = vmatmul.mubr.bf16.gmra.mrb[0].mxu0 %v1064
        %v1355 = vpop.f32.mrb[0].mxu0
        %v1356 = vadd.f32 %v1019, %v1355
        %v1357 = vpop.f32.mrb[0].mxu0
        %v1358 = vadd.f32 %v1019, %v1357
        %v1359 = vpop.f32.mrb[0].mxu0
        %v1360 = vadd.f32 %v1024, %v1359
        %v1361 = vpop.f32.mrb[0].mxu0
        %v1362 = vadd.f32 %v1024, %v1361
        %1363 = vmatprep.mubr.bf16.mxu0 %v1299
        %1364 = vmatmul.mubr.bf16.gmra.mrb[0].mxu0 %v1066
        %v1365 = vpop.f32.mrb[0].mxu0
        %v1366 = vadd.f32 %v1029, %v1365
        %v1367 = vpop.f32.mrb[0].mxu0
        %v1368 = vadd.f32 %v1029, %v1367
        %v1369 = vpop.f32.mrb[0].mxu0
        %v1370 = vadd.f32 %v1034, %v1369
        %v1371 = vpop.f32.mrb[0].mxu0
        %v1372 = vadd.f32 %v1034, %v1371
        %1373 = vdwg.mxu0
        %1374 = vmatprep.subr.bf16.mxu0 %v1195
        %1375 = vmatpush1.bf16.msra.mxu0 %v1194
        %1376 = vmatprep.subr.bf16.mxu0 %v1199
        %1377 = vmatpush1.bf16.msra.mxu0 %v1198
        %1378 = vmatprep.subr.bf16.mxu0 %v1203
        %1379 = vmatpush1.bf16.msra.mxu0 %v1202
        %1380 = vmatprep.subr.bf16.mxu0 %v1207
        %1381 = vmatpush1.bf16.msra.mxu0 %v1206
        %1382 = vmatprep.subr.bf16.mxu0 %v1211
        %1383 = vmatpush1.bf16.msra.mxu0 %v1210
        %1384 = vmatprep.subr.bf16.mxu0 %v1215
        %1385 = vmatpush1.bf16.msra.mxu0 %v1214
        %1386 = vmatprep.subr.bf16.mxu0 %v1219
        %1387 = vmatpush1.bf16.msra.mxu0 %v1218
        %1388 = vmatprep.subr.bf16.mxu0 %v1223
        %1389 = vmatpush1.bf16.msra.mxu0 %v1222
        %1390 = vmatprep.subr.bf16.mxu0 %v1227
        %1391 = vmatpush1.bf16.msra.mxu0 %v1226
        %1392 = vmatprep.subr.bf16.mxu0 %v1231
        %1393 = vmatpush1.bf16.msra.mxu0 %v1230
        %1394 = vmatprep.subr.bf16.mxu0 %v1235
        %1395 = vmatpush1.bf16.msra.mxu0 %v1234
        %1396 = vmatprep.subr.bf16.mxu0 %v1239
        %1397 = vmatpush1.bf16.msra.mxu0 %v1238
        %1398 = vmatprep.subr.bf16.mxu0 0
        %1399 = vmatpush1.bf16.msra.mxu0 0
        %1400 = vmatprep.subr.bf16.mxu0 0
        %1401 = vmatpush1.bf16.msra.mxu0 0
        %1402 = vmatprep.subr.bf16.mxu0 0
        %1403 = vmatpush1.bf16.msra.mxu0 0
        %1404 = vmatprep.subr.bf16.mxu0 0
        %1405 = vmatpush1.bf16.msra.mxu0 0
        %1406 = vmatprep.mubr.bf16.mxu0 %v1290
        %1407 = vmatmul.mubr.bf16.gmra.mrb[0].mxu0 %v1060
        %v1408 = vpop.f32.mrb[0].mxu0
        %v1409 = vadd.f32 %v999, %v1408
        %v1410 = vpop.f32.mrb[0].mxu0
        %v1411 = vadd.f32 %v999, %v1410
        %v1412 = vpop.f32.mrb[0].mxu0
        %v1413 = vadd.f32 %v1004, %v1412
        %v1414 = vpop.f32.mrb[0].mxu0
        %v1415 = vadd.f32 %v1004, %v1414
        %1416 = vmatprep.mubr.bf16.mxu0 %v1293
        %1417 = vmatmul.mubr.bf16.gmra.mrb[0].mxu0 %v1062
        %v1418 = vpop.f32.mrb[0].mxu0
        %v1419 = vadd.f32 %v1009, %v1418
        %v1420 = vpop.f32.mrb[0].mxu0
        %v1421 = vadd.f32 %v1009, %v1420
        %v1422 = vpop.f32.mrb[0].mxu0
        %v1423 = vadd.f32 %v1014, %v1422
        %v1424 = vpop.f32.mrb[0].mxu0
        %v1425 = vadd.f32 %v1014, %v1424
        %1426 = vmatprep.mubr.bf16.mxu0 %v1296
        %1427 = vmatmul.mubr.bf16.gmra.mrb[0].mxu0 %v1064
        %v1428 = vpop.f32.mrb[0].mxu0
        %v1429 = vadd.f32 %v1019, %v1428
        %v1430 = vpop.f32.mrb[0].mxu0
        %v1431 = vadd.f32 %v1019, %v1430
        %v1432 = vpop.f32.mrb[0].mxu0
        %v1433 = vadd.f32 %v1024, %v1432
        %v1434 = vpop.f32.mrb[0].mxu0
        %v1435 = vadd.f32 %v1024, %v1434
        %1436 = vmatprep.mubr.bf16.mxu0 %v1299
        %1437 = vmatmul.mubr.bf16.gmra.mrb[0].mxu0 %v1066
        %v1438 = vpop.f32.mrb[0].mxu0
        %v1439 = vadd.f32 %v1029, %v1438
        %v1440 = vpop.f32.mrb[0].mxu0
        %v1441 = vadd.f32 %v1029, %v1440
        %v1442 = vpop.f32.mrb[0].mxu0
        %v1443 = vadd.f32 %v1034, %v1442
        %v1444 = vpop.f32.mrb[0].mxu0
        %v1445 = vadd.f32 %v1034, %v1444
        %1446 = vdwg.mxu0
        %v1447 = vmax.f32 %v1336, 0.0
        %v1448 = vmax.f32 %v1338, 0.0
        %v1449 = vmax.f32 %v1409, 0.0
        %v1450 = vmax.f32 %v1411, 0.0
        %v1451 = vmax.f32 %v1340, 0.0
        %v1452 = vmax.f32 %v1342, 0.0
        %v1453 = vmax.f32 %v1413, 0.0
        %v1454 = vmax.f32 %v1415, 0.0
        %v1455 = vmax.f32 %v1346, 0.0
        %v1456 = vmax.f32 %v1348, 0.0
        %v1457 = vmax.f32 %v1419, 0.0
        %v1458 = vmax.f32 %v1421, 0.0
        %v1459 = vmax.f32 %v1350, 0.0
        %v1460 = vmax.f32 %v1352, 0.0
        %v1461 = vmax.f32 %v1423, 0.0
        %v1462 = vmax.f32 %v1425, 0.0
        %v1463 = vmax.f32 %v1356, 0.0
        %v1464 = vmax.f32 %v1358, 0.0
        %v1465 = vmax.f32 %v1429, 0.0
        %v1466 = vmax.f32 %v1431, 0.0
        %v1467 = vmax.f32 %v1360, 0.0
        %v1468 = vmax.f32 %v1362, 0.0
        %v1469 = vmax.f32 %v1433, 0.0
        %v1470 = vmax.f32 %v1435, 0.0
        %v1471 = vmax.f32 %v1366, 0.0
        %v1472 = vmax.f32 %v1368, 0.0
        %v1473 = vmax.f32 %v1439, 0.0
        %v1474 = vmax.f32 %v1441, 0.0
        %v1475 = vmax.f32 %v1370, 0.0
        %v1476 = vmax.f32 %v1372, 0.0
        %v1477 = vmax.f32 %v1443, 0.0
        %v1478 = vmax.f32 %v1445, 0.0
        %v1479 = vld [vmem:[%s5] sm:$0xf]
        %v1480 = vld [vmem:[%s5 + $0x4] sm:$0xf]
        %v1481 = vld [vmem:[%s5 + $0x8] sm:$0xf]
        %v1482 = vld [vmem:[%s5 + $0xc] sm:$0xf]
        %v1483 = vld [vmem:[%s5 + $0x10] sm:$0xf]
        %v1484 = vld [vmem:[%s5 + $0x14] sm:$0xf]
        %v1485 = vld [vmem:[%s5 + $0x18] sm:$0xf]
        %v1486 = vld [vmem:[%s5 + $0x1c] sm:$0xf]
        %v1487 = vld [vmem:[%s6] sm:$0xff]
        %v1488 = vld [vmem:[%s6 + $0x8] sm:$0xff]
        %v1489 = vld [vmem:[%s6 + $0x10] sm:$0xff]
        %v1490 = vld [vmem:[%s6 + $0x18] sm:$0xff]
        %v1491 = vld [vmem:[%s6 + $0x20] sm:$0xff]
        %v1492 = vld [vmem:[%s6 + $0x28] sm:$0xff]
        %v1493 = vld [vmem:[%s6 + $0x30] sm:$0xff]
        %v1494 = vld [vmem:[%s6 + $0x38] sm:$0xff]
        %1496 = vset.pattern.permute.xlu0 0
        %1497 = vperm.xlu0 %1496, %v1487
        %v1498 = vpop.permute.xlu0 %1497
        %1501 = vset.pattern.permute.xlu0 0
        %1502 = vperm.xlu0 %1501, %v1488
        %v1503 = vpop.permute.xlu0 %1502
        %1506 = vset.pattern.permute.xlu0 0
        %1507 = vperm.xlu0 %1506, %v1489
        %v1508 = vpop.permute.xlu0 %1507
        %1511 = vset.pattern.permute.xlu0 0
        %1512 = vperm.xlu0 %1511, %v1490
        %v1513 = vpop.permute.xlu0 %1512
        %1516 = vset.pattern.permute.xlu0 0
        %1517 = vperm.xlu0 %1516, %v1491
        %v1518 = vpop.permute.xlu0 %1517
        %1521 = vset.pattern.permute.xlu0 0
        %1522 = vperm.xlu0 %1521, %v1492
        %v1523 = vpop.permute.xlu0 %1522
        %1526 = vset.pattern.permute.xlu0 0
        %1527 = vperm.xlu0 %1526, %v1493
        %v1528 = vpop.permute.xlu0 %1527
        %1531 = vset.pattern.permute.xlu0 0
        %1532 = vperm.xlu0 %1531, %v1494
        %v1533 = vpop.permute.xlu0 %1532
        %v1543 = vunpack.c.l.b16 %v1479
        %v1544 = vunpack.c.l.b16 %v1480
        %v1545 = vunpack.c.l.b16 %v1481
        %v1546 = vunpack.c.l.b16 %v1482
        %v1547 = vunpack.c.l.b16 %v1483
        %v1548 = vunpack.c.l.b16 %v1484
        %v1549 = vunpack.c.l.b16 %v1485
        %v1550 = vunpack.c.l.b16 %v1486
        %v1551 = vpack.c.b16 %v1544, %v1543
        %v1552 = vpack.c.b16 %v1546, %v1545
        %v1553 = vpack.c.b16 %v1548, %v1547
        %v1554 = vpack.c.b16 %v1550, %v1549
        %vm1555 = vcmask 261120
        %v1557 = vsel %vm1555, %v1551, 0
        %v1560 = vsel %vm1555, %v1552, 0
        %v1563 = vsel %vm1555, %v1553, 0
        %v1566 = vsel %vm1555, %v1554, 0
        %1568 = vmatprep.subr.bf16.mxu0 %v345
        %1569 = vmatpush1.bf16.msra.mxu0 %v344
        %1570 = vmatprep.subr.bf16.mxu0 %v349
        %1571 = vmatpush1.bf16.msra.mxu0 %v348
        %1572 = vmatprep.subr.bf16.mxu0 0
        %1573 = vmatpush1.bf16.msra.mxu0 0
        %1574 = vmatprep.subr.bf16.mxu0 0
        %1575 = vmatpush1.bf16.msra.mxu0 0
        %1576 = vmatprep.subr.bf16.mxu0 0
        %1577 = vmatpush1.bf16.msra.mxu0 0
        %1578 = vmatprep.subr.bf16.mxu0 0
        %1579 = vmatpush1.bf16.msra.mxu0 0
        %1580 = vmatprep.subr.bf16.mxu0 0
        %1581 = vmatpush1.bf16.msra.mxu0 0
        %1582 = vmatprep.subr.bf16.mxu0 0
        %1583 = vmatpush1.bf16.msra.mxu0 0
        %1584 = vmatprep.subr.bf16.mxu0 0
        %1585 = vmatpush1.bf16.msra.mxu0 0
        %1586 = vmatprep.subr.bf16.mxu0 0
        %1587 = vmatpush1.bf16.msra.mxu0 0
        %1588 = vmatprep.subr.bf16.mxu0 0
        %1589 = vmatpush1.bf16.msra.mxu0 0
        %1590 = vmatprep.subr.bf16.mxu0 0
        %1591 = vmatpush1.bf16.msra.mxu0 0
        %1592 = vmatprep.subr.bf16.mxu0 0
        %1593 = vmatpush1.bf16.msra.mxu0 0
        %1594 = vmatprep.subr.bf16.mxu0 0
        %1595 = vmatpush1.bf16.msra.mxu0 0
        %1596 = vmatprep.subr.bf16.mxu0 0
        %1597 = vmatpush1.bf16.msra.mxu0 0
        %1598 = vmatprep.subr.bf16.mxu0 0
        %1599 = vmatpush1.bf16.msra.mxu0 0
        %1600 = vmatprep.mubr.bf16.mxu0 0
        %1601 = vmatmul.mubr.bf16.gmra.mrb[0].mxu0 %v1557
        %v1602 = vpop.f32.mrb[0].mxu0
        %v1603 = vadd.f32 %v1498, %v1602
        %v1604 = vpop.f32.mrb[0].mxu0
        %v1605 = vadd.f32 %v1498, %v1604
        %v1606 = vpop.f32.mrb[0].mxu0
        %v1607 = vadd.f32 %v1503, %v1606
        %v1608 = vpop.f32.mrb[0].mxu0
        %v1609 = vadd.f32 %v1503, %v1608
        %1610 = vmatprep.mubr.bf16.mxu0 0
        %1611 = vmatmul.mubr.bf16.gmra.mrb[0].mxu0 %v1560
        %v1612 = vpop.f32.mrb[0].mxu0
        %v1613 = vadd.f32 %v1508, %v1612
        %v1614 = vpop.f32.mrb[0].mxu0
        %v1615 = vadd.f32 %v1508, %v1614
        %v1616 = vpop.f32.mrb[0].mxu0
        %v1617 = vadd.f32 %v1513, %v1616
        %v1618 = vpop.f32.mrb[0].mxu0
        %v1619 = vadd.f32 %v1513, %v1618
        %1620 = vmatprep.mubr.bf16.mxu0 0
        %1621 = vmatmul.mubr.bf16.gmra.mrb[0].mxu0 %v1563
        %v1622 = vpop.f32.mrb[0].mxu0
        %v1623 = vadd.f32 %v1518, %v1622
        %v1624 = vpop.f32.mrb[0].mxu0
        %v1625 = vadd.f32 %v1518, %v1624
        %v1626 = vpop.f32.mrb[0].mxu0
        %v1627 = vadd.f32 %v1523, %v1626
        %v1628 = vpop.f32.mrb[0].mxu0
        %v1629 = vadd.f32 %v1523, %v1628
        %1630 = vmatprep.mubr.bf16.mxu0 0
        %1631 = vmatmul.mubr.bf16.gmra.mrb[0].mxu0 %v1566
        %v1632 = vpop.f32.mrb[0].mxu0
        %v1633 = vadd.f32 %v1528, %v1632
        %v1634 = vpop.f32.mrb[0].mxu0
        %v1635 = vadd.f32 %v1528, %v1634
        %v1636 = vpop.f32.mrb[0].mxu0
        %v1637 = vadd.f32 %v1533, %v1636
        %v1638 = vpop.f32.mrb[0].mxu0
        %v1639 = vadd.f32 %v1533, %v1638
        %1640 = vdwg.mxu0
        %1641 = vmatprep.subr.bf16.mxu0 %v347
        %1642 = vmatpush1.bf16.msra.mxu0 %v346
        %1643 = vmatprep.subr.bf16.mxu0 %v351
        %1644 = vmatpush1.bf16.msra.mxu0 %v350
        %1645 = vmatprep.subr.bf16.mxu0 0
        %1646 = vmatpush1.bf16.msra.mxu0 0
        %1647 = vmatprep.subr.bf16.mxu0 0
        %1648 = vmatpush1.bf16.msra.mxu0 0
        %1649 = vmatprep.subr.bf16.mxu0 0
        %1650 = vmatpush1.bf16.msra.mxu0 0
        %1651 = vmatprep.subr.bf16.mxu0 0
        %1652 = vmatpush1.bf16.msra.mxu0 0
        %1653 = vmatprep.subr.bf16.mxu0 0
        %1654 = vmatpush1.bf16.msra.mxu0 0
        %1655 = vmatprep.subr.bf16.mxu0 0
        %1656 = vmatpush1.bf16.msra.mxu0 0
        %1657 = vmatprep.subr.bf16.mxu0 0
        %1658 = vmatpush1.bf16.msra.mxu0 0
        %1659 = vmatprep.subr.bf16.mxu0 0
        %1660 = vmatpush1.bf16.msra.mxu0 0
        %1661 = vmatprep.subr.bf16.mxu0 0
        %1662 = vmatpush1.bf16.msra.mxu0 0
        %1663 = vmatprep.subr.bf16.mxu0 0
        %1664 = vmatpush1.bf16.msra.mxu0 0
        %1665 = vmatprep.subr.bf16.mxu0 0
        %1666 = vmatpush1.bf16.msra.mxu0 0
        %1667 = vmatprep.subr.bf16.mxu0 0
        %1668 = vmatpush1.bf16.msra.mxu0 0
        %1669 = vmatprep.subr.bf16.mxu0 0
        %1670 = vmatpush1.bf16.msra.mxu0 0
        %1671 = vmatprep.subr.bf16.mxu0 0
        %1672 = vmatpush1.bf16.msra.mxu0 0
        %1673 = vmatprep.mubr.bf16.mxu0 0
        %1674 = vmatmul.mubr.bf16.gmra.mrb[0].mxu0 %v1557
        %v1675 = vpop.f32.mrb[0].mxu0
        %v1676 = vadd.f32 %v1498, %v1675
        %v1677 = vpop.f32.mrb[0].mxu0
        %v1678 = vadd.f32 %v1498, %v1677
        %v1679 = vpop.f32.mrb[0].mxu0
        %v1680 = vadd.f32 %v1503, %v1679
        %v1681 = vpop.f32.mrb[0].mxu0
        %v1682 = vadd.f32 %v1503, %v1681
        %1683 = vmatprep.mubr.bf16.mxu0 0
        %1684 = vmatmul.mubr.bf16.gmra.mrb[0].mxu0 %v1560
        %v1685 = vpop.f32.mrb[0].mxu0
        %v1686 = vadd.f32 %v1508, %v1685
        %v1687 = vpop.f32.mrb[0].mxu0
        %v1688 = vadd.f32 %v1508, %v1687
        %v1689 = vpop.f32.mrb[0].mxu0
        %v1690 = vadd.f32 %v1513, %v1689
        %v1691 = vpop.f32.mrb[0].mxu0
        %v1692 = vadd.f32 %v1513, %v1691
        %1693 = vmatprep.mubr.bf16.mxu0 0
        %1694 = vmatmul.mubr.bf16.gmra.mrb[0].mxu0 %v1563
        %v1695 = vpop.f32.mrb[0].mxu0
        %v1696 = vadd.f32 %v1518, %v1695
        %v1697 = vpop.f32.mrb[0].mxu0
        %v1698 = vadd.f32 %v1518, %v1697
        %v1699 = vpop.f32.mrb[0].mxu0
        %v1700 = vadd.f32 %v1523, %v1699
        %v1701 = vpop.f32.mrb[0].mxu0
        %v1702 = vadd.f32 %v1523, %v1701
        %1703 = vmatprep.mubr.bf16.mxu0 0
        %1704 = vmatmul.mubr.bf16.gmra.mrb[0].mxu0 %v1566
        %v1705 = vpop.f32.mrb[0].mxu0
        %v1706 = vadd.f32 %v1528, %v1705
        %v1707 = vpop.f32.mrb[0].mxu0
        %v1708 = vadd.f32 %v1528, %v1707
        %v1709 = vpop.f32.mrb[0].mxu0
        %v1710 = vadd.f32 %v1533, %v1709
        %v1711 = vpop.f32.mrb[0].mxu0
        %v1712 = vadd.f32 %v1533, %v1711
        %1713 = vdwg.mxu0
        %v1714 = vadd.f32 %v1447, %v1603
        %v1715 = vadd.f32 %v1448, %v1605
        %v1716 = vadd.f32 %v1449, %v1676
        %v1717 = vadd.f32 %v1450, %v1678
        %v1718 = vadd.f32 %v1451, %v1607
        %v1719 = vadd.f32 %v1452, %v1609
        %v1720 = vadd.f32 %v1453, %v1680
        %v1721 = vadd.f32 %v1454, %v1682
        %v1722 = vadd.f32 %v1455, %v1613
        %v1723 = vadd.f32 %v1456, %v1615
        %v1724 = vadd.f32 %v1457, %v1686
        %v1725 = vadd.f32 %v1458, %v1688
        %v1726 = vadd.f32 %v1459, %v1617
        %v1727 = vadd.f32 %v1460, %v1619
        %v1728 = vadd.f32 %v1461, %v1690
        %v1729 = vadd.f32 %v1462, %v1692
        %v1730 = vadd.f32 %v1463, %v1623
        %v1731 = vadd.f32 %v1464, %v1625
        %v1732 = vadd.f32 %v1465, %v1696
        %v1733 = vadd.f32 %v1466, %v1698
        %v1734 = vadd.f32 %v1467, %v1627
        %v1735 = vadd.f32 %v1468, %v1629
        %v1736 = vadd.f32 %v1469, %v1700
        %v1737 = vadd.f32 %v1470, %v1702
        %v1738 = vadd.f32 %v1471, %v1633
        %v1739 = vadd.f32 %v1472, %v1635
        %v1740 = vadd.f32 %v1473, %v1706
        %v1741 = vadd.f32 %v1474, %v1708
        %v1742 = vadd.f32 %v1475, %v1637
        %v1743 = vadd.f32 %v1476, %v1639
        %v1744 = vadd.f32 %v1477, %v1710
        %v1745 = vadd.f32 %v1478, %v1712
        %v1746 = vmax.f32 %v1714, 0.0
        %v1747 = vmax.f32 %v1715, 0.0
        %v1748 = vmax.f32 %v1716, 0.0
        %v1749 = vmax.f32 %v1717, 0.0
        %v1750 = vmax.f32 %v1718, 0.0
        %v1751 = vmax.f32 %v1719, 0.0
        %v1752 = vmax.f32 %v1720, 0.0
        %v1753 = vmax.f32 %v1721, 0.0
        %v1754 = vmax.f32 %v1722, 0.0
        %v1755 = vmax.f32 %v1723, 0.0
        %v1756 = vmax.f32 %v1724, 0.0
        %v1757 = vmax.f32 %v1725, 0.0
        %v1758 = vmax.f32 %v1726, 0.0
        %v1759 = vmax.f32 %v1727, 0.0
        %v1760 = vmax.f32 %v1728, 0.0
        %v1761 = vmax.f32 %v1729, 0.0
        %v1762 = vmax.f32 %v1730, 0.0
        %v1763 = vmax.f32 %v1731, 0.0
        %v1764 = vmax.f32 %v1732, 0.0
        %v1765 = vmax.f32 %v1733, 0.0
        %v1766 = vmax.f32 %v1734, 0.0
        %v1767 = vmax.f32 %v1735, 0.0
        %v1768 = vmax.f32 %v1736, 0.0
        %v1769 = vmax.f32 %v1737, 0.0
        %v1770 = vmax.f32 %v1738, 0.0
        %v1771 = vmax.f32 %v1739, 0.0
        %v1772 = vmax.f32 %v1740, 0.0
        %v1773 = vmax.f32 %v1741, 0.0
        %v1774 = vmax.f32 %v1742, 0.0
        %v1775 = vmax.f32 %v1743, 0.0
        %v1776 = vmax.f32 %v1744, 0.0
        %v1777 = vmax.f32 %v1745, 0.0
        %1778 = vst [vmem:[%s314] sm:$0xff] %v1746
        %1779 = vst [vmem:[%s314 + $0x8] sm:$0xff] %v1747
        %1780 = vst [vmem:[%s314 + $0x10] sm:$0xff] %v1748
        %1781 = vst [vmem:[%s314 + $0x18] sm:$0xff] %v1749
        %1782 = vst [vmem:[%s314 + $0x20] sm:$0xff] %v1750
        %1783 = vst [vmem:[%s314 + $0x28] sm:$0xff] %v1751
        %1784 = vst [vmem:[%s314 + $0x30] sm:$0xff] %v1752
        %1785 = vst [vmem:[%s314 + $0x38] sm:$0xff] %v1753
        %1786 = vst [vmem:[%s314 + $0x40] sm:$0xff] %v1754
        %1787 = vst [vmem:[%s314 + $0x48] sm:$0xff] %v1755
        %1788 = vst [vmem:[%s314 + $0x50] sm:$0xff] %v1756
        %1789 = vst [vmem:[%s314 + $0x58] sm:$0xff] %v1757
        %1790 = vst [vmem:[%s314 + $0x60] sm:$0xff] %v1758
        %1791 = vst [vmem:[%s314 + $0x68] sm:$0xff] %v1759
        %1792 = vst [vmem:[%s314 + $0x70] sm:$0xff] %v1760
        %1793 = vst [vmem:[%s314 + $0x78] sm:$0xff] %v1761
        %1794 = vst [vmem:[%s314 + $0x80] sm:$0xff] %v1762
        %1795 = vst [vmem:[%s314 + $0x88] sm:$0xff] %v1763
        %1796 = vst [vmem:[%s314 + $0x90] sm:$0xff] %v1764
        %1797 = vst [vmem:[%s314 + $0x98] sm:$0xff] %v1765
        %1798 = vst [vmem:[%s314 + $0xa0] sm:$0xff] %v1766
        %1799 = vst [vmem:[%s314 + $0xa8] sm:$0xff] %v1767
        %1800 = vst [vmem:[%s314 + $0xb0] sm:$0xff] %v1768
        %1801 = vst [vmem:[%s314 + $0xb8] sm:$0xff] %v1769
        %1802 = vst [vmem:[%s314 + $0xc0] sm:$0xff] %v1770
        %1803 = vst [vmem:[%s314 + $0xc8] sm:$0xff] %v1771
        %1804 = vst [vmem:[%s314 + $0xd0] sm:$0xff] %v1772
        %1805 = vst [vmem:[%s314 + $0xd8] sm:$0xff] %v1773
        %1806 = vst [vmem:[%s314 + $0xe0] sm:$0xff] %v1774
        %1807 = vst [vmem:[%s314 + $0xe8] sm:$0xff] %v1775
        %1808 = vst [vmem:[%s314 + $0xf0] sm:$0xff] %v1776
        %1809 = vst [vmem:[%s314 + $0xf8] sm:$0xff] %v1777
        %vm1810 = vcmask 1048544
        %1811 = vst.msk [vmem:[#allocation2] sm:$0xff] %vm1810, %v347
        %1812 = vst.msk [vmem:[#allocation2 + $0x28] sm:$0xff] %vm1810, %v351
        %1813 = vst.msk [vmem:[#allocation3] sm:$0xff] %vm1810, %v811
        %1814 = vst.msk [vmem:[#allocation3 + $0x28] sm:$0xff] %vm1810, %v815
        %1815 = vst.msk [vmem:[#allocation3 + $0x50] sm:$0xff] %vm1810, %v819
        %1816 = vst.msk [vmem:[#allocation3 + $0x78] sm:$0xff] %vm1810, %v823
        %s1817 = sand.u32 %s200, 1
        %s1818 = scalar_lea.sflag [#allocation6], %s1817
        %s1819 = sand.u32 %s200, 1
        %s1820 = smul.addr %s1819, 256
        %s1821 = scalar_lea.vmem [#allocation7], %s1820
        // Predicated region
        $region57: #{tpu_custom_call.1} parent=47 // pred_check
          %p1822 = pneg %p210
        $region58: #{tpu_custom_call.1} parent=47 // pred_check_branch
          %1824 = sbr.rel (%p1822) target = $region60
        $region59: #{tpu_custom_call.1} parent=47 // pred_region
          %s1825 = smul.u32 4, %s29
          %s1827 = ssub.s32 4096, 4096
          %1828 = vsyncadd %s1818, %s1827
          %s1829 = smul.addr %s28, 128
          %s1830 = sadd.s32 %s1825, %s1829
          %s1831 = smul.addr %s1830, 128
          %s1832 = scalar_lea.hbm %s7, %s1831
          %s1833 = sshll.u32 %s1821, 4
          %s1834 = int_to_ptr.vmem [resolvable:$true] %s1833
          %1839 = dma.vmem_to_hbm [thread:$0]  %s1834, 4096, %s1832, %s1818, 512, 2048, 32
        $region60: #{tpu_custom_call.1} parent=47 // pred_fallthru
          _
      $region48: #{tpu_custom_call.1} parent=5 // pred_fallthru
        _
      %p1840 = scmp.le.s32.totalorder 2, %s19
      // Predicated region
      $region61: #{tpu_custom_call.1} parent=5 // pred_check
        %p1841 = pneg %p1840
      $region62: #{tpu_custom_call.1} parent=5 // pred_check_branch
        %1843 = sbr.rel (%p1841) target = $region64
      $region63: #{tpu_custom_call.1} parent=5 // pred_region
        %s1844 = ssub.s32 %s19, 2
        // Predicated region
        $region65: #{tpu_custom_call.1} parent=63 // pred_check
          %p1845 = pneg %p216
        $region66: #{tpu_custom_call.1} parent=63 // pred_check_branch
          %1847 = sbr.rel (%p1845) target = $region68
        $region67: #{tpu_custom_call.1} parent=63 // pred_region
          %s1848 = sand.u32 %s201, 1
          %s1849 = scalar_lea.sflag [#allocation6], %s1848
          %s1850 = sand.u32 %s201, 1
          %s1851 = smul.addr %s1850, 256
          %s1852 = scalar_lea.vmem [#allocation7], %s1851
          %1853 = dma.done %s1849, 4096
        $region68: #{tpu_custom_call.1} parent=63 // pred_fallthru
          _
      $region64: #{tpu_custom_call.1} parent=5 // pred_fallthru
        _
    $region6: #{tpu_custom_call.1} parent=1 // loop_footer
      %s23 = sadd.s32 1, %s19
    $region7: #{tpu_custom_call.1} parent=1 // loop_footer_branch
      %18 = sbr.rel target = $region3
    $region8: #{tpu_custom_call.1} parent=1 // loop_exit
      _
    %1854 = vsyncpa [#allocation5], 1
    %s1855 = scalar_lea.sflag [#allocation5], 1
    %1856 = vsyncpa %s1855, 1
    %1857 = vsyncpa [#allocation6], 1
    %s1858 = scalar_lea.sflag [#allocation6], 1
    %1859 = vsyncpa %s1858, 1

</llo_original>
